<compile_context>
chip_gen: v5e
topology: v5e:2x2
jax: 0.10.0
libtpu: 0.0.40
codegen_flags: <defaults>
</compile_context>

<pallas_src>
import functools

import jax
import jax.numpy as jnp
from jax.experimental import pallas as pl
from jax.experimental.pallas import tpu as pltpu

EPS = 1e-5
_HI = jax.lax.Precision.HIGHEST
_VMEM_LIMIT = 32 * 1024 * 1024        # explicit scoped-VMEM budget (v5e..v7x safe)


def _round_up(x, m):
    return (x + m - 1) // m * m


def _pick_tile(m):
    """Row-tile size: large (<=512) tiles for real shapes, but keep >=2 grid
    steps when possible so the pipelined / cross-tile-accumulator path is
    actually exercised even at small test sizes."""
    tm = min(512, _round_up(m, 8))
    if _round_up(m, tm) == tm and m > 8:
        tm = max(8, _round_up((m + 1) // 2, 8))
    return tm


# ----------------------------- Pallas kernels ------------------------------ #

def _matmul_stats_kernel(p_ref, w_ref, y_ref, sum_ref, sq_ref):
    """bf16 matmul tile (f32 accumulation on the MXU) + per-channel sum and
    sum-of-squares accumulated across the M grid axis (training-mode BN)."""
    @pl.when(pl.program_id(0) == 0)
    def _():
        sum_ref[...] = jnp.zeros_like(sum_ref)
        sq_ref[...] = jnp.zeros_like(sq_ref)

    y = jnp.dot(p_ref[...], w_ref[...], preferred_element_type=jnp.float32)
    y_ref[...] = y
    sum_ref[...] += jnp.sum(y, axis=0, keepdims=True)
    sq_ref[...] += jnp.sum(y * y, axis=0, keepdims=True)


def _scale_shift_relu_kernel(y_ref, s_ref, b_ref, o_ref):
    """Fused BN normalize (folded per-channel scale/shift) + ReLU, bf16 out."""
    o_ref[...] = jnp.maximum(
        y_ref[...] * s_ref[...] + b_ref[...], 0.0).astype(o_ref.dtype)


def _bn_add_relu_kernel(y_ref, i_ref, s_ref, b_ref, si_ref, bi_ref, o_ref):
    """Fused BN(conv2) + [BN(downsample conv) or identity] add + ReLU."""
    o_ref[...] = jnp.maximum(
        y_ref[...] * s_ref[...] + b_ref[...]
        + i_ref[...] * si_ref[...] + bi_ref[...], 0.0)


# --------------------------- pallas_call wrappers --------------------------- #

def _conv_matmul_stats(p, w, tm):
    """p: (Mpad, K) bf16, w: (K, Cpad) bf16 -> (y (Mpad,Cpad) f32,
    per-channel sum (1,Cpad) f32, per-channel sum-of-squares (1,Cpad) f32)."""
    mpad, k = p.shape
    cpad = w.shape[1]
    return pl.pallas_call(
        _matmul_stats_kernel,
        out_shape=(
            jax.ShapeDtypeStruct((mpad, cpad), jnp.float32),
            jax.ShapeDtypeStruct((1, cpad), jnp.float32),
            jax.ShapeDtypeStruct((1, cpad), jnp.float32),
        ),
        grid=(mpad // tm,),
        in_specs=[
            pl.BlockSpec((tm, k), lambda i: (i, 0)),
            pl.BlockSpec((k, cpad), lambda i: (0, 0)),      # resident weights
        ],
        out_specs=(
            pl.BlockSpec((tm, cpad), lambda i: (i, 0)),
            pl.BlockSpec((1, cpad), lambda i: (0, 0)),      # resident accumulator
            pl.BlockSpec((1, cpad), lambda i: (0, 0)),      # resident accumulator
        ),
        compiler_params=pltpu.CompilerParams(
            dimension_semantics=("arbitrary",),   # cross-tile BN accumulation
            vmem_limit_bytes=_VMEM_LIMIT),
    )(p, w)


def _scale_shift_relu(y, scale, shift, tm):
    mpad, cpad = y.shape
    return pl.pallas_call(
        _scale_shift_relu_kernel,
        out_shape=jax.ShapeDtypeStruct((mpad, cpad), jnp.bfloat16),
        grid=(mpad // tm,),
        in_specs=[
            pl.BlockSpec((tm, cpad), lambda i: (i, 0)),
            pl.BlockSpec((1, cpad), lambda i: (0, 0)),
            pl.BlockSpec((1, cpad), lambda i: (0, 0)),
        ],
        out_specs=pl.BlockSpec((tm, cpad), lambda i: (i, 0)),
        compiler_params=pltpu.CompilerParams(
            dimension_semantics=("parallel",),
            vmem_limit_bytes=_VMEM_LIMIT),
    )(y, scale, shift)


def _bn_add_relu(y, idn, s, b, si, bi, tm):
    mpad, cpad = y.shape
    return pl.pallas_call(
        _bn_add_relu_kernel,
        out_shape=jax.ShapeDtypeStruct((mpad, cpad), jnp.float32),
        grid=(mpad // tm,),
        in_specs=[
            pl.BlockSpec((tm, cpad), lambda i: (i, 0)),
            pl.BlockSpec((tm, cpad), lambda i: (i, 0)),
            pl.BlockSpec((1, cpad), lambda i: (0, 0)),
            pl.BlockSpec((1, cpad), lambda i: (0, 0)),
            pl.BlockSpec((1, cpad), lambda i: (0, 0)),
            pl.BlockSpec((1, cpad), lambda i: (0, 0)),
        ],
        out_specs=pl.BlockSpec((tm, cpad), lambda i: (i, 0)),
        compiler_params=pltpu.CompilerParams(
            dimension_semantics=("parallel",),
            vmem_limit_bytes=_VMEM_LIMIT),
    )(y, idn, s, b, si, bi)


# ------------------------------- JAX glue ---------------------------------- #

def _im2col_3x3(x_nhwc, stride):
    """3x3, padding=1 patch extraction. Returns (N*Ho*Wo, 9*C) and (N,Ho,Wo)."""
    N, H, W, C = x_nhwc.shape
    Ho = (H + 2 - 3) // stride + 1
    Wo = (W + 2 - 3) // stride + 1
    xp = jnp.pad(x_nhwc, ((0, 0), (1, 1), (1, 1), (0, 0)))
    cols = []
    for kh in range(3):
        for kw in range(3):
            patch = jax.lax.slice(
                xp,
                (0, kh, kw, 0),
                (N, kh + (Ho - 1) * stride + 1, kw + (Wo - 1) * stride + 1, C),
                (1, stride, stride, 1))
            cols.append(patch)
    p = jnp.concatenate(cols, axis=-1)            # (N,Ho,Wo,9*C), order (kh,kw,c)
    return p.reshape(N * Ho * Wo, 9 * C), (N, Ho, Wo)


def _w3x3_to_mat(w, cpad):   # (Cout,Cin,3,3) -> (9*Cin, Cpad) bf16, rows (kh,kw,cin)
    cout, cin = w.shape[0], w.shape[1]
    m = jnp.transpose(w, (2, 3, 1, 0)).reshape(9 * cin, cout)
    return jnp.pad(m, ((0, 0), (0, cpad - cout))).astype(jnp.bfloat16)


def _pad_rows(p, mpad):
    return jnp.pad(p, ((0, mpad - p.shape[0]), (0, 0)))


def _bn_coeffs(col_sum, col_sq, count, gamma, beta, cpad):
    """Fold train-mode BN (batch stats, biased var) into per-channel scale/shift."""
    cout = gamma.shape[0]
    g = jnp.pad(gamma, (0, cpad - cout)).reshape(1, cpad)
    b = jnp.pad(beta, (0, cpad - cout)).reshape(1, cpad)
    mean = col_sum / count
    var = col_sq / count - mean * mean
    scale = g * jax.lax.rsqrt(var + EPS)
    shift = b - mean * scale
    return scale, shift


@functools.partial(jax.jit, static_argnames=("stride", "downsample"))
def basic_block_forward(x_nchw, params, stride, downsample):
    x = jnp.transpose(x_nchw, (0, 2, 3, 1)).astype(jnp.float32)   # NHWC
    N, H, W, Cin = x.shape
    Cout = params["conv1"].shape[0]
    Cpad = _round_up(Cout, 128)
    x_bf = x.astype(jnp.bfloat16)

    # --- conv1 (+ fused BN stats) -------------------------------------------
    p1, (N, Ho, Wo) = _im2col_3x3(x_bf, stride)
    M = N * Ho * Wo
    TM = _pick_tile(M)
    Mpad = _round_up(M, TM)

    p1 = _pad_rows(p1, Mpad)
    y1, s1, q1 = _conv_matmul_stats(p1, _w3x3_to_mat(params["conv1"], Cpad), TM)
    sc1, sh1 = _bn_coeffs(s1, q1, M, params["bn1_gamma"], params["bn1_beta"], Cpad)

    # --- BN1 + ReLU (bf16 activation that feeds conv2) -----------------------
    a1 = _scale_shift_relu(y1, sc1, sh1, TM)                  # (Mpad, Cpad) bf16

    # --- conv2 (+ fused BN stats) ---------------------------------------------
    a1_img = a1[:M, :Cout].reshape(N, Ho, Wo, Cout)
    p2, _ = _im2col_3x3(a1_img, 1)
    p2 = _pad_rows(p2, Mpad)
    y2, s2, q2 = _conv_matmul_stats(p2, _w3x3_to_mat(params["conv2"], Cpad), TM)
    sc2, sh2 = _bn_coeffs(s2, q2, M, params["bn2_gamma"], params["bn2_beta"], Cpad)

    # --- identity branch (downsample BN fused into the final kernel) ---------
    if downsample:
        pd = x_bf[:, ::stride, ::stride, :].reshape(M, Cin)
        pd = _pad_rows(pd, Mpad)
        wd = jnp.pad(params["convd"].reshape(Cout, Cin).T,
                     ((0, 0), (0, Cpad - Cout))).astype(jnp.bfloat16)
        yd, sd, qd = _conv_matmul_stats(pd, wd, TM)
        sci, shi = _bn_coeffs(sd, qd, M,
                              params["bnd_gamma"], params["bnd_beta"], Cpad)
        idn = yd                                              # raw conv; BN fused below
    else:
        if stride != 1 or Cin != Cout:
            raise ValueError("downsample=False requires stride==1 and Cin==Cout")
        idn = _pad_rows(jnp.pad(x.reshape(M, Cin), ((0, 0), (0, Cpad - Cin))), Mpad)
        sci = jnp.ones((1, Cpad), jnp.float32)
        shi = jnp.zeros((1, Cpad), jnp.float32)

    # --- BN2 + (BN_d | identity) residual add + ReLU --------------------------
    out = _bn_add_relu(y2, idn, sc2, sh2, sci, shi, TM)
    out = out[:M, :Cout].reshape(N, Ho, Wo, Cout)
    return jnp.transpose(out, (0, 3, 1, 2))                   # back to NCHW


# --------------------------- pure-JAX reference ----------------------------- #

def _bn_train_ref(y, gamma, beta):
    mu = y.mean(axis=(0, 2, 3), keepdims=True)
    var = ((y - mu) ** 2).mean(axis=(0, 2, 3), keepdims=True)
    return ((y - mu) / jnp.sqrt(var + EPS)) * gamma.reshape(1, -1, 1, 1) \
        + beta.reshape(1, -1, 1, 1)


def basic_block_reference(x, params, stride, downsample):
    def conv(x_, w, s):
        pad = w.shape[2] // 2
        return jax.lax.conv_general_dilated(
            x_, w, (s, s), [(pad, pad), (pad, pad)],
            dimension_numbers=("NCHW", "OIHW", "NCHW"), precision=_HI)
    i = x
    y = conv(x, params["conv1"], stride)
    y = jax.nn.relu(_bn_train_ref(y, params["bn1_gamma"], params["bn1_beta"]))
    y = conv(y, params["conv2"], 1)
    y = _bn_train_ref(y, params["bn2_gamma"], params["bn2_beta"])
    if downsample:
        i = conv(i, params["convd"], stride)
        i = _bn_train_ref(i, params["bnd_gamma"], params["bnd_beta"])
    return jax.nn.relu(y + i)


# ---------------------------------- main ------------------------------------ #

if __name__ == "__main__":
    key = jax.random.PRNGKey(0)
    N, Cin, H, W = 2, 4, 16, 16
    Cout, stride, downsample = 8, 2, True

    k1, k2, k3, kx = jax.random.split(key, 4)
    params = {
        "conv1": jax.random.normal(k1, (Cout, Cin, 3, 3), jnp.float32) * 0.2,
        "conv2": jax.random.normal(k2, (Cout, Cout, 3, 3), jnp.float32) * 0.2,
        "convd": jax.random.normal(k3, (Cout, Cin, 1, 1), jnp.float32) * 0.2,
        # PyTorch BatchNorm2d init: weight=1, bias=0
        "bn1_gamma": jnp.ones((Cout,), jnp.float32),
        "bn1_beta": jnp.zeros((Cout,), jnp.float32),
        "bn2_gamma": jnp.ones((Cout,), jnp.float32),
        "bn2_beta": jnp.zeros((Cout,), jnp.float32),
        "bnd_gamma": jnp.ones((Cout,), jnp.float32),
        "bnd_beta": jnp.zeros((Cout,), jnp.float32),
    }
    x = jax.random.normal(kx, (N, Cin, H, W), jnp.float32)

    out = basic_block_forward(x, params, stride=stride, downsample=downsample)
    out = jax.block_until_ready(out)

    ref = basic_block_reference(x, params, stride, downsample)
    assert out.shape == ref.shape == (N, Cout, H // stride, W // stride), out.shape
    max_err = float(jnp.max(jnp.abs(out - ref)))
    # bf16 MXU operands (f32 accumulation) vs the f32 HIGHEST-precision reference.
    assert jnp.allclose(out, ref, atol=6e-2, rtol=6e-2), f"max abs diff {max_err}"

    print("KERNEL_OK")
</pallas_src>

<mosaic_0001>
module attributes {stable_mosaic.version = 11 : i64} {
  func.func @_matmul_stats_kernel(%arg0: i32, %arg1: memref<64x36xbf16, #tpu.memory_space<vmem>>, %arg2: memref<36x128xbf16, #tpu.memory_space<vmem>>, %arg3: memref<64x128xf32, #tpu.memory_space<vmem>>, %arg4: memref<1x128xf32, #tpu.memory_space<vmem>>, %arg5: memref<1x128xf32, #tpu.memory_space<vmem>>) attributes {dimension_semantics = [#tpu.dimension_semantics<arbitrary>], iteration_bounds = array<i64: 2>, scalar_prefetch = 0 : i64, scratch_operands = 0 : i64, tpu.core_type = #tpu.core_type<tc>, window_params = [{transform_indices = @transform_0, window_bounds = array<i64: 64, 36>}, {pipeline_mode = #tpu.pipeline_mode<synchronous>, transform_indices = @transform_1, window_bounds = array<i64: 36, 128>}, {transform_indices = @transform_2, window_bounds = array<i64: 64, 128>}, {pipeline_mode = #tpu.pipeline_mode<synchronous>, transform_indices = @transform_3, window_bounds = array<i64: 1, 128>}, {pipeline_mode = #tpu.pipeline_mode<synchronous>, transform_indices = @transform_4, window_bounds = array<i64: 1, 128>}]} {
    %c0_i32 = arith.constant 0 : i32
    %0 = arith.cmpi eq, %arg0, %c0_i32 : i32
    %1 = arith.extui %0 : i1 to i32
    %c0_i32_0 = arith.constant 0 : i32
    %2 = arith.cmpi ne, %1, %c0_i32_0 : i32
    scf.if %2 {
      %cst_16 = arith.constant 0.000000e+00 : f32
      %18 = vector.broadcast %cst_16 : f32 to vector<1x128xf32>
      %c0_17 = arith.constant 0 : index
      %c0_18 = arith.constant 0 : index
      %19 = vector.load %arg4[%c0_17, %c0_18] : memref<1x128xf32, #tpu.memory_space<vmem>>, vector<1x128xf32>
      tpu.vector_store %arg4[%c0_17, %c0_18], %18 {strides = array<i32>} : memref<1x128xf32, #tpu.memory_space<vmem>>, vector<1x128xf32>,
      %cst_19 = arith.constant 0.000000e+00 : f32
      %20 = vector.broadcast %cst_19 : f32 to vector<1x128xf32>
      %c0_20 = arith.constant 0 : index
      %c0_21 = arith.constant 0 : index
      %21 = vector.load %arg5[%c0_20, %c0_21] : memref<1x128xf32, #tpu.memory_space<vmem>>, vector<1x128xf32>
      tpu.vector_store %arg5[%c0_20, %c0_21], %20 {strides = array<i32>} : memref<1x128xf32, #tpu.memory_space<vmem>>, vector<1x128xf32>,
    } else {
    }
    %c0 = arith.constant 0 : index
    %c0_1 = arith.constant 0 : index
    %3 = vector.load %arg1[%c0, %c0_1] : memref<64x36xbf16, #tpu.memory_space<vmem>>, vector<64x36xbf16>
    %c0_2 = arith.constant 0 : index
    %c0_3 = arith.constant 0 : index
    %4 = vector.load %arg2[%c0_2, %c0_3] : memref<36x128xbf16, #tpu.memory_space<vmem>>, vector<36x128xbf16>
    %cst = arith.constant dense<0.000000e+00> : vector<64x128xf32>
    %5 = tpu.matmul %3, %4, %cst {dimension_numbers = #tpu.dot_dimension_numbers<[1], [0], [0], [1], [0, 0, 1, 1], [], []>} : vector<64x36xbf16>, vector<36x128xbf16>, vector<64x128xf32> -> vector<64x128xf32>
    %c0_4 = arith.constant 0 : index
    %c0_5 = arith.constant 0 : index
    %6 = vector.load %arg3[%c0_4, %c0_5] : memref<64x128xf32, #tpu.memory_space<vmem>>, vector<64x128xf32>
    tpu.vector_store %arg3[%c0_4, %c0_5], %5 {strides = array<i32>} : memref<64x128xf32, #tpu.memory_space<vmem>>, vector<64x128xf32>,
    %c0_6 = arith.constant 0 : index
    %c0_7 = arith.constant 0 : index
    %7 = vector.load %arg4[%c0_6, %c0_7] : memref<1x128xf32, #tpu.memory_space<vmem>>, vector<1x128xf32>
    %cst_8 = arith.constant dense<0.000000e+00> : vector<128xf32>
    %8 = vector.multi_reduction <add>, %5, %cst_8 [0] : vector<64x128xf32> to vector<128xf32>
    %9 = vector.shape_cast %8 : vector<128xf32> to vector<1x128xf32>
    %10 = arith.addf %7, %9 : vector<1x128xf32>
    %c0_9 = arith.constant 0 : index
    %c0_10 = arith.constant 0 : index
    %11 = vector.load %arg4[%c0_9, %c0_10] : memref<1x128xf32, #tpu.memory_space<vmem>>, vector<1x128xf32>
    tpu.vector_store %arg4[%c0_9, %c0_10], %10 {strides = array<i32>} : memref<1x128xf32, #tpu.memory_space<vmem>>, vector<1x128xf32>,
    %c0_11 = arith.constant 0 : index
    %c0_12 = arith.constant 0 : index
    %12 = vector.load %arg5[%c0_11, %c0_12] : memref<1x128xf32, #tpu.memory_space<vmem>>, vector<1x128xf32>
    %13 = arith.mulf %5, %5 : vector<64x128xf32>
    %cst_13 = arith.constant dense<0.000000e+00> : vector<128xf32>
    %14 = vector.multi_reduction <add>, %13, %cst_13 [0] : vector<64x128xf32> to vector<128xf32>
    %15 = vector.shape_cast %14 : vector<128xf32> to vector<1x128xf32>
    %16 = arith.addf %12, %15 : vector<1x128xf32>
    %c0_14 = arith.constant 0 : index
    %c0_15 = arith.constant 0 : index
    %17 = vector.load %arg5[%c0_14, %c0_15] : memref<1x128xf32, #tpu.memory_space<vmem>>, vector<1x128xf32>
    tpu.vector_store %arg5[%c0_14, %c0_15], %16 {strides = array<i32>} : memref<1x128xf32, #tpu.memory_space<vmem>>, vector<1x128xf32>,
    return
  }
  func.func @transform_0(%arg0: i32) -> (i32, i32) {
    %c0_i32 = arith.constant 0 : i32
    %c0_i32_0 = arith.constant 0 : i32
    return %arg0, %c0_i32 : i32, i32
  }
  func.func @transform_1(%arg0: i32) -> (i32, i32) {
    %c0_i32 = arith.constant 0 : i32
    %c0_i32_0 = arith.constant 0 : i32
    %c0_i32_1 = arith.constant 0 : i32
    return %c0_i32, %c0_i32_0 : i32, i32
  }
  func.func @transform_2(%arg0: i32) -> (i32, i32) {
    %c0_i32 = arith.constant 0 : i32
    %c0_i32_0 = arith.constant 0 : i32
    return %arg0, %c0_i32 : i32, i32
  }
  func.func @transform_3(%arg0: i32) -> (i32, i32) {
    %c0_i32 = arith.constant 0 : i32
    %c0_i32_0 = arith.constant 0 : i32
    %c0_i32_1 = arith.constant 0 : i32
    return %c0_i32, %c0_i32_0 : i32, i32
  }
  func.func @transform_4(%arg0: i32) -> (i32, i32) {
    %c0_i32 = arith.constant 0 : i32
    %c0_i32_0 = arith.constant 0 : i32
    %c0_i32_1 = arith.constant 0 : i32
    return %c0_i32, %c0_i32_0 : i32, i32
  }
}

module attributes {stable_mosaic.version = 11 : i64} {
  func.func @_scale_shift_relu_kernel(%arg0: i32, %arg1: memref<64x128xf32, #tpu.memory_space<vmem>>, %arg2: memref<1x128xf32, #tpu.memory_space<vmem>>, %arg3: memref<1x128xf32, #tpu.memory_space<vmem>>, %arg4: memref<64x128xbf16, #tpu.memory_space<vmem>>) attributes {dimension_semantics = [#tpu.dimension_semantics<parallel>], iteration_bounds = array<i64: 2>, scalar_prefetch = 0 : i64, scratch_operands = 0 : i64, tpu.core_type = #tpu.core_type<tc>, window_params = [{transform_indices = @transform_0, window_bounds = array<i64: 64, 128>}, {pipeline_mode = #tpu.pipeline_mode<synchronous>, transform_indices = @transform_1, window_bounds = array<i64: 1, 128>}, {pipeline_mode = #tpu.pipeline_mode<synchronous>, transform_indices = @transform_2, window_bounds = array<i64: 1, 128>}, {transform_indices = @transform_3, window_bounds = array<i64: 64, 128>}]} {
    %c0 = arith.constant 0 : index
    %c0_0 = arith.constant 0 : index
    %0 = vector.load %arg1[%c0, %c0_0] : memref<64x128xf32, #tpu.memory_space<vmem>>, vector<64x128xf32>
    %c0_1 = arith.constant 0 : index
    %c0_2 = arith.constant 0 : index
    %1 = vector.load %arg2[%c0_1, %c0_2] : memref<1x128xf32, #tpu.memory_space<vmem>>, vector<1x128xf32>
    %2 = vector.broadcast %1 : vector<1x128xf32> to vector<64x128xf32>
    %3 = arith.mulf %0, %2 : vector<64x128xf32>
    %c0_3 = arith.constant 0 : index
    %c0_4 = arith.constant 0 : index
    %4 = vector.load %arg3[%c0_3, %c0_4] : memref<1x128xf32, #tpu.memory_space<vmem>>, vector<1x128xf32>
    %5 = vector.broadcast %4 : vector<1x128xf32> to vector<64x128xf32>
    %6 = arith.addf %3, %5 : vector<64x128xf32>
    %cst = arith.constant 0.000000e+00 : f32
    %7 = vector.broadcast %cst : f32 to vector<64x128xf32>
    %8 = arith.maximumf %6, %7 : vector<64x128xf32>
    %9 = arith.truncf %8 : vector<64x128xf32> to vector<64x128xbf16>
    %c0_5 = arith.constant 0 : index
    %c0_6 = arith.constant 0 : index
    %10 = vector.load %arg4[%c0_5, %c0_6] : memref<64x128xbf16, #tpu.memory_space<vmem>>, vector<64x128xbf16>
    tpu.vector_store %arg4[%c0_5, %c0_6], %9 {strides = array<i32>} : memref<64x128xbf16, #tpu.memory_space<vmem>>, vector<64x128xbf16>,
    return
  }
  func.func @transform_0(%arg0: i32) -> (i32, i32) {
    %c0_i32 = arith.constant 0 : i32
    %c0_i32_0 = arith.constant 0 : i32
    return %arg0, %c0_i32 : i32, i32
  }
  func.func @transform_1(%arg0: i32) -> (i32, i32) {
    %c0_i32 = arith.constant 0 : i32
    %c0_i32_0 = arith.constant 0 : i32
    %c0_i32_1 = arith.constant 0 : i32
    return %c0_i32, %c0_i32_0 : i32, i32
  }
  func.func @transform_2(%arg0: i32) -> (i32, i32) {
    %c0_i32 = arith.constant 0 : i32
    %c0_i32_0 = arith.constant 0 : i32
    %c0_i32_1 = arith.constant 0 : i32
    return %c0_i32, %c0_i32_0 : i32, i32
  }
  func.func @transform_3(%arg0: i32) -> (i32, i32) {
    %c0_i32 = arith.constant 0 : i32
    %c0_i32_0 = arith.constant 0 : i32
    return %arg0, %c0_i32 : i32, i32
  }
}

module attributes {stable_mosaic.version = 11 : i64} {
  func.func @_matmul_stats_kernel(%arg0: i32, %arg1: memref<64x72xbf16, #tpu.memory_space<vmem>>, %arg2: memref<72x128xbf16, #tpu.memory_space<vmem>>, %arg3: memref<64x128xf32, #tpu.memory_space<vmem>>, %arg4: memref<1x128xf32, #tpu.memory_space<vmem>>, %arg5: memref<1x128xf32, #tpu.memory_space<vmem>>) attributes {dimension_semantics = [#tpu.dimension_semantics<arbitrary>], iteration_bounds = array<i64: 2>, scalar_prefetch = 0 : i64, scratch_operands = 0 : i64, tpu.core_type = #tpu.core_type<tc>, window_params = [{transform_indices = @transform_0, window_bounds = array<i64: 64, 72>}, {pipeline_mode = #tpu.pipeline_mode<synchronous>, transform_indices = @transform_1, window_bounds = array<i64: 72, 128>}, {transform_indices = @transform_2, window_bounds = array<i64: 64, 128>}, {pipeline_mode = #tpu.pipeline_mode<synchronous>, transform_indices = @transform_3, window_bounds = array<i64: 1, 128>}, {pipeline_mode = #tpu.pipeline_mode<synchronous>, transform_indices = @transform_4, window_bounds = array<i64: 1, 128>}]} {
    %c0_i32 = arith.constant 0 : i32
    %0 = arith.cmpi eq, %arg0, %c0_i32 : i32
    %1 = arith.extui %0 : i1 to i32
    %c0_i32_0 = arith.constant 0 : i32
    %2 = arith.cmpi ne, %1, %c0_i32_0 : i32
    scf.if %2 {
      %cst_16 = arith.constant 0.000000e+00 : f32
      %18 = vector.broadcast %cst_16 : f32 to vector<1x128xf32>
      %c0_17 = arith.constant 0 : index
      %c0_18 = arith.constant 0 : index
      %19 = vector.load %arg4[%c0_17, %c0_18] : memref<1x128xf32, #tpu.memory_space<vmem>>, vector<1x128xf32>
      tpu.vector_store %arg4[%c0_17, %c0_18], %18 {strides = array<i32>} : memref<1x128xf32, #tpu.memory_space<vmem>>, vector<1x128xf32>,
      %cst_19 = arith.constant 0.000000e+00 : f32
      %20 = vector.broadcast %cst_19 : f32 to vector<1x128xf32>
      %c0_20 = arith.constant 0 : index
      %c0_21 = arith.constant 0 : index
      %21 = vector.load %arg5[%c0_20, %c0_21] : memref<1x128xf32, #tpu.memory_space<vmem>>, vector<1x128xf32>
      tpu.vector_store %arg5[%c0_20, %c0_21], %20 {strides = array<i32>} : memref<1x128xf32, #tpu.memory_space<vmem>>, vector<1x128xf32>,
    } else {
    }
    %c0 = arith.constant 0 : index
    %c0_1 = arith.constant 0 : index
    %3 = vector.load %arg1[%c0, %c0_1] : memref<64x72xbf16, #tpu.memory_space<vmem>>, vector<64x72xbf16>
    %c0_2 = arith.constant 0 : index
    %c0_3 = arith.constant 0 : index
    %4 = vector.load %arg2[%c0_2, %c0_3] : memref<72x128xbf16, #tpu.memory_space<vmem>>, vector<72x128xbf16>
    %cst = arith.constant dense<0.000000e+00> : vector<64x128xf32>
    %5 = tpu.matmul %3, %4, %cst {dimension_numbers = #tpu.dot_dimension_numbers<[1], [0], [0], [1], [0, 0, 1, 1], [], []>} : vector<64x72xbf16>, vector<72x128xbf16>, vector<64x128xf32> -> vector<64x128xf32>
    %c0_4 = arith.constant 0 : index
    %c0_5 = arith.constant 0 : index
    %6 = vector.load %arg3[%c0_4, %c0_5] : memref<64x128xf32, #tpu.memory_space<vmem>>, vector<64x128xf32>
    tpu.vector_store %arg3[%c0_4, %c0_5], %5 {strides = array<i32>} : memref<64x128xf32, #tpu.memory_space<vmem>>, vector<64x128xf32>,
    %c0_6 = arith.constant 0 : index
    %c0_7 = arith.constant 0 : index
    %7 = vector.load %arg4[%c0_6, %c0_7] : memref<1x128xf32, #tpu.memory_space<vmem>>, vector<1x128xf32>
    %cst_8 = arith.constant dense<0.000000e+00> : vector<128xf32>
    %8 = vector.multi_reduction <add>, %5, %cst_8 [0] : vector<64x128xf32> to vector<128xf32>
    %9 = vector.shape_cast %8 : vector<128xf32> to vector<1x128xf32>
    %10 = arith.addf %7, %9 : vector<1x128xf32>
    %c0_9 = arith.constant 0 : index
    %c0_10 = arith.constant 0 : index
    %11 = vector.load %arg4[%c0_9, %c0_10] : memref<1x128xf32, #tpu.memory_space<vmem>>, vector<1x128xf32>
    tpu.vector_store %arg4[%c0_9, %c0_10], %10 {strides = array<i32>} : memref<1x128xf32, #tpu.memory_space<vmem>>, vector<1x128xf32>,
    %c0_11 = arith.constant 0 : index
    %c0_12 = arith.constant 0 : index
    %12 = vector.load %arg5[%c0_11, %c0_12] : memref<1x128xf32, #tpu.memory_space<vmem>>, vector<1x128xf32>
    %13 = arith.mulf %5, %5 : vector<64x128xf32>
    %cst_13 = arith.constant dense<0.000000e+00> : vector<128xf32>
    %14 = vector.multi_reduction <add>, %13, %cst_13 [0] : vector<64x128xf32> to vector<128xf32>
    %15 = vector.shape_cast %14 : vector<128xf32> to vector<1x128xf32>
    %16 = arith.addf %12, %15 : vector<1x128xf32>
    %c0_14 = arith.constant 0 : index
    %c0_15 = arith.constant 0 : index
    %17 = vector.load %arg5[%c0_14, %c0_15] : memref<1x128xf32, #tpu.memory_space<vmem>>, vector<1x128xf32>
    tpu.vector_store %arg5[%c0_14, %c0_15], %16 {strides = array<i32>} : memref<1x128xf32, #tpu.memory_space<vmem>>, vector<1x128xf32>,
    return
  }
  func.func @transform_0(%arg0: i32) -> (i32, i32) {
    %c0_i32 = arith.constant 0 : i32
    %c0_i32_0 = arith.constant 0 : i32
    return %arg0, %c0_i32 : i32, i32
  }
  func.func @transform_1(%arg0: i32) -> (i32, i32) {
    %c0_i32 = arith.constant 0 : i32
    %c0_i32_0 = arith.constant 0 : i32
    %c0_i32_1 = arith.constant 0 : i32
    return %c0_i32, %c0_i32_0 : i32, i32
  }
  func.func @transform_2(%arg0: i32) -> (i32, i32) {
    %c0_i32 = arith.constant 0 : i32
    %c0_i32_0 = arith.constant 0 : i32
    return %arg0, %c0_i32 : i32, i32
  }
  func.func @transform_3(%arg0: i32) -> (i32, i32) {
    %c0_i32 = arith.constant 0 : i32
    %c0_i32_0 = arith.constant 0 : i32
    %c0_i32_1 = arith.constant 0 : i32
    return %c0_i32, %c0_i32_0 : i32, i32
  }
  func.func @transform_4(%arg0: i32) -> (i32, i32) {
    %c0_i32 = arith.constant 0 : i32
    %c0_i32_0 = arith.constant 0 : i32
    %c0_i32_1 = arith.constant 0 : i32
    return %c0_i32, %c0_i32_0 : i32, i32
  }
}

module attributes {stable_mosaic.version = 11 : i64} {
  func.func @_bn_add_relu_kernel(%arg0: i32, %arg1: memref<64x128xf32, #tpu.memory_space<vmem>>, %arg2: memref<64x128xf32, #tpu.memory_space<vmem>>, %arg3: memref<1x128xf32, #tpu.memory_space<vmem>>, %arg4: memref<1x128xf32, #tpu.memory_space<vmem>>, %arg5: memref<1x128xf32, #tpu.memory_space<vmem>>, %arg6: memref<1x128xf32, #tpu.memory_space<vmem>>, %arg7: memref<64x128xf32, #tpu.memory_space<vmem>>) attributes {dimension_semantics = [#tpu.dimension_semantics<parallel>], iteration_bounds = array<i64: 2>, scalar_prefetch = 0 : i64, scratch_operands = 0 : i64, tpu.core_type = #tpu.core_type<tc>, window_params = [{transform_indices = @transform_0, window_bounds = array<i64: 64, 128>}, {transform_indices = @transform_1, window_bounds = array<i64: 64, 128>}, {pipeline_mode = #tpu.pipeline_mode<synchronous>, transform_indices = @transform_2, window_bounds = array<i64: 1, 128>}, {pipeline_mode = #tpu.pipeline_mode<synchronous>, transform_indices = @transform_3, window_bounds = array<i64: 1, 128>}, {pipeline_mode = #tpu.pipeline_mode<synchronous>, transform_indices = @transform_4, window_bounds = array<i64: 1, 128>}, {pipeline_mode = #tpu.pipeline_mode<synchronous>, transform_indices = @transform_5, window_bounds = array<i64: 1, 128>}, {transform_indices = @transform_6, window_bounds = array<i64: 64, 128>}]} {
    %c0 = arith.constant 0 : index
    %c0_0 = arith.constant 0 : index
    %0 = vector.load %arg1[%c0, %c0_0] : memref<64x128xf32, #tpu.memory_space<vmem>>, vector<64x128xf32>
    %c0_1 = arith.constant 0 : index
    %c0_2 = arith.constant 0 : index
    %1 = vector.load %arg3[%c0_1, %c0_2] : memref<1x128xf32, #tpu.memory_space<vmem>>, vector<1x128xf32>
    %2 = vector.broadcast %1 : vector<1x128xf32> to vector<64x128xf32>
    %3 = arith.mulf %0, %2 : vector<64x128xf32>
    %c0_3 = arith.constant 0 : index
    %c0_4 = arith.constant 0 : index
    %4 = vector.load %arg4[%c0_3, %c0_4] : memref<1x128xf32, #tpu.memory_space<vmem>>, vector<1x128xf32>
    %5 = vector.broadcast %4 : vector<1x128xf32> to vector<64x128xf32>
    %6 = arith.addf %3, %5 : vector<64x128xf32>
    %c0_5 = arith.constant 0 : index
    %c0_6 = arith.constant 0 : index
    %7 = vector.load %arg2[%c0_5, %c0_6] : memref<64x128xf32, #tpu.memory_space<vmem>>, vector<64x128xf32>
    %c0_7 = arith.constant 0 : index
    %c0_8 = arith.constant 0 : index
    %8 = vector.load %arg5[%c0_7, %c0_8] : memref<1x128xf32, #tpu.memory_space<vmem>>, vector<1x128xf32>
    %9 = vector.broadcast %8 : vector<1x128xf32> to vector<64x128xf32>
    %10 = arith.mulf %7, %9 : vector<64x128xf32>
    %11 = arith.addf %6, %10 : vector<64x128xf32>
    %c0_9 = arith.constant 0 : index
    %c0_10 = arith.constant 0 : index
    %12 = vector.load %arg6[%c0_9, %c0_10] : memref<1x128xf32, #tpu.memory_space<vmem>>, vector<1x128xf32>
    %13 = vector.broadcast %12 : vector<1x128xf32> to vector<64x128xf32>
    %14 = arith.addf %11, %13 : vector<64x128xf32>
    %cst = arith.constant 0.000000e+00 : f32
    %15 = vector.broadcast %cst : f32 to vector<64x128xf32>
    %16 = arith.maximumf %14, %15 : vector<64x128xf32>
    %c0_11 = arith.constant 0 : index
    %c0_12 = arith.constant 0 : index
    %17 = vector.load %arg7[%c0_11, %c0_12] : memref<64x128xf32, #tpu.memory_space<vmem>>, vector<64x128xf32>
    tpu.vector_store %arg7[%c0_11, %c0_12], %16 {strides = array<i32>} : memref<64x128xf32, #tpu.memory_space<vmem>>, vector<64x128xf32>,
    return
  }
  func.func @transform_0(%arg0: i32) -> (i32, i32) {
    %c0_i32 = arith.constant 0 : i32
    %c0_i32_0 = arith.constant 0 : i32
    return %arg0, %c0_i32 : i32, i32
  }
  func.func @transform_1(%arg0: i32) -> (i32, i32) {
    %c0_i32 = arith.constant 0 : i32
    %c0_i32_0 = arith.constant 0 : i32
    return %arg0, %c0_i32 : i32, i32
  }
  func.func @transform_2(%arg0: i32) -> (i32, i32) {
    %c0_i32 = arith.constant 0 : i32
    %c0_i32_0 = arith.constant 0 : i32
    %c0_i32_1 = arith.constant 0 : i32
    return %c0_i32, %c0_i32_0 : i32, i32
  }
  func.func @transform_3(%arg0: i32) -> (i32, i32) {
    %c0_i32 = arith.constant 0 : i32
    %c0_i32_0 = arith.constant 0 : i32
    %c0_i32_1 = arith.constant 0 : i32
    return %c0_i32, %c0_i32_0 : i32, i32
  }
  func.func @transform_4(%arg0: i32) -> (i32, i32) {
    %c0_i32 = arith.constant 0 : i32
    %c0_i32_0 = arith.constant 0 : i32
    %c0_i32_1 = arith.constant 0 : i32
    return %c0_i32, %c0_i32_0 : i32, i32
  }
  func.func @transform_5(%arg0: i32) -> (i32, i32) {
    %c0_i32 = arith.constant 0 : i32
    %c0_i32_0 = arith.constant 0 : i32
    %c0_i32_1 = arith.constant 0 : i32
    return %c0_i32, %c0_i32_0 : i32, i32
  }
  func.func @transform_6(%arg0: i32) -> (i32, i32) {
    %c0_i32 = arith.constant 0 : i32
    %c0_i32_0 = arith.constant 0 : i32
    return %arg0, %c0_i32 : i32, i32
  }
}

module attributes {stable_mosaic.version = 11 : i64} {
  func.func @_matmul_stats_kernel(%arg0: i32, %arg1: memref<64x4xbf16, #tpu.memory_space<vmem>>, %arg2: memref<4x128xbf16, #tpu.memory_space<vmem>>, %arg3: memref<64x128xf32, #tpu.memory_space<vmem>>, %arg4: memref<1x128xf32, #tpu.memory_space<vmem>>, %arg5: memref<1x128xf32, #tpu.memory_space<vmem>>) attributes {dimension_semantics = [#tpu.dimension_semantics<arbitrary>], iteration_bounds = array<i64: 2>, scalar_prefetch = 0 : i64, scratch_operands = 0 : i64, tpu.core_type = #tpu.core_type<tc>, window_params = [{transform_indices = @transform_0, window_bounds = array<i64: 64, 4>}, {pipeline_mode = #tpu.pipeline_mode<synchronous>, transform_indices = @transform_1, window_bounds = array<i64: 4, 128>}, {transform_indices = @transform_2, window_bounds = array<i64: 64, 128>}, {pipeline_mode = #tpu.pipeline_mode<synchronous>, transform_indices = @transform_3, window_bounds = array<i64: 1, 128>}, {pipeline_mode = #tpu.pipeline_mode<synchronous>, transform_indices = @transform_4, window_bounds = array<i64: 1, 128>}]} {
    %c0_i32 = arith.constant 0 : i32
    %0 = arith.cmpi eq, %arg0, %c0_i32 : i32
    %1 = arith.extui %0 : i1 to i32
    %c0_i32_0 = arith.constant 0 : i32
    %2 = arith.cmpi ne, %1, %c0_i32_0 : i32
    scf.if %2 {
      %cst_16 = arith.constant 0.000000e+00 : f32
      %18 = vector.broadcast %cst_16 : f32 to vector<1x128xf32>
      %c0_17 = arith.constant 0 : index
      %c0_18 = arith.constant 0 : index
      %19 = vector.load %arg4[%c0_17, %c0_18] : memref<1x128xf32, #tpu.memory_space<vmem>>, vector<1x128xf32>
      tpu.vector_store %arg4[%c0_17, %c0_18], %18 {strides = array<i32>} : memref<1x128xf32, #tpu.memory_space<vmem>>, vector<1x128xf32>,
      %cst_19 = arith.constant 0.000000e+00 : f32
      %20 = vector.broadcast %cst_19 : f32 to vector<1x128xf32>
      %c0_20 = arith.constant 0 : index
      %c0_21 = arith.constant 0 : index
      %21 = vector.load %arg5[%c0_20, %c0_21] : memref<1x128xf32, #tpu.memory_space<vmem>>, vector<1x128xf32>
      tpu.vector_store %arg5[%c0_20, %c0_21], %20 {strides = array<i32>} : memref<1x128xf32, #tpu.memory_space<vmem>>, vector<1x128xf32>,
    } else {
    }
    %c0 = arith.constant 0 : index
    %c0_1 = arith.constant 0 : index
    %3 = vector.load %arg1[%c0, %c0_1] : memref<64x4xbf16, #tpu.memory_space<vmem>>, vector<64x4xbf16>
    %c0_2 = arith.constant 0 : index
    %c0_3 = arith.constant 0 : index
    %4 = vector.load %arg2[%c0_2, %c0_3] : memref<4x128xbf16, #tpu.memory_space<vmem>>, vector<4x128xbf16>
    %cst = arith.constant dense<0.000000e+00> : vector<64x128xf32>
    %5 = tpu.matmul %3, %4, %cst {dimension_numbers = #tpu.dot_dimension_numbers<[1], [0], [0], [1], [0, 0, 1, 1], [], []>} : vector<64x4xbf16>, vector<4x128xbf16>, vector<64x128xf32> -> vector<64x128xf32>
    %c0_4 = arith.constant 0 : index
    %c0_5 = arith.constant 0 : index
    %6 = vector.load %arg3[%c0_4, %c0_5] : memref<64x128xf32, #tpu.memory_space<vmem>>, vector<64x128xf32>
    tpu.vector_store %arg3[%c0_4, %c0_5], %5 {strides = array<i32>} : memref<64x128xf32, #tpu.memory_space<vmem>>, vector<64x128xf32>,
    %c0_6 = arith.constant 0 : index
    %c0_7 = arith.constant 0 : index
    %7 = vector.load %arg4[%c0_6, %c0_7] : memref<1x128xf32, #tpu.memory_space<vmem>>, vector<1x128xf32>
    %cst_8 = arith.constant dense<0.000000e+00> : vector<128xf32>
    %8 = vector.multi_reduction <add>, %5, %cst_8 [0] : vector<64x128xf32> to vector<128xf32>
    %9 = vector.shape_cast %8 : vector<128xf32> to vector<1x128xf32>
    %10 = arith.addf %7, %9 : vector<1x128xf32>
    %c0_9 = arith.constant 0 : index
    %c0_10 = arith.constant 0 : index
    %11 = vector.load %arg4[%c0_9, %c0_10] : memref<1x128xf32, #tpu.memory_space<vmem>>, vector<1x128xf32>
    tpu.vector_store %arg4[%c0_9, %c0_10], %10 {strides = array<i32>} : memref<1x128xf32, #tpu.memory_space<vmem>>, vector<1x128xf32>,
    %c0_11 = arith.constant 0 : index
    %c0_12 = arith.constant 0 : index
    %12 = vector.load %arg5[%c0_11, %c0_12] : memref<1x128xf32, #tpu.memory_space<vmem>>, vector<1x128xf32>
    %13 = arith.mulf %5, %5 : vector<64x128xf32>
    %cst_13 = arith.constant dense<0.000000e+00> : vector<128xf32>
    %14 = vector.multi_reduction <add>, %13, %cst_13 [0] : vector<64x128xf32> to vector<128xf32>
    %15 = vector.shape_cast %14 : vector<128xf32> to vector<1x128xf32>
    %16 = arith.addf %12, %15 : vector<1x128xf32>
    %c0_14 = arith.constant 0 : index
    %c0_15 = arith.constant 0 : index
    %17 = vector.load %arg5[%c0_14, %c0_15] : memref<1x128xf32, #tpu.memory_space<vmem>>, vector<1x128xf32>
    tpu.vector_store %arg5[%c0_14, %c0_15], %16 {strides = array<i32>} : memref<1x128xf32, #tpu.memory_space<vmem>>, vector<1x128xf32>,
    return
  }
  func.func @transform_0(%arg0: i32) -> (i32, i32) {
    %c0_i32 = arith.constant 0 : i32
    %c0_i32_0 = arith.constant 0 : i32
    return %arg0, %c0_i32 : i32, i32
  }
  func.func @transform_1(%arg0: i32) -> (i32, i32) {
    %c0_i32 = arith.constant 0 : i32
    %c0_i32_0 = arith.constant 0 : i32
    %c0_i32_1 = arith.constant 0 : i32
    return %c0_i32, %c0_i32_0 : i32, i32
  }
  func.func @transform_2(%arg0: i32) -> (i32, i32) {
    %c0_i32 = arith.constant 0 : i32
    %c0_i32_0 = arith.constant 0 : i32
    return %arg0, %c0_i32 : i32, i32
  }
  func.func @transform_3(%arg0: i32) -> (i32, i32) {
    %c0_i32 = arith.constant 0 : i32
    %c0_i32_0 = arith.constant 0 : i32
    %c0_i32_1 = arith.constant 0 : i32
    return %c0_i32, %c0_i32_0 : i32, i32
  }
  func.func @transform_4(%arg0: i32) -> (i32, i32) {
    %c0_i32 = arith.constant 0 : i32
    %c0_i32_0 = arith.constant 0 : i32
    %c0_i32_1 = arith.constant 0 : i32
    return %c0_i32, %c0_i32_0 : i32, i32
  }
}

</mosaic_0001>

<llo_original>
// kernel: basic_block_forward.6
$region0: #{basic_block_forward.6}
  #allocation0 [shape = 'u32[]', space=smem, size = 0x4, offset = 0x4, fixed_abs, tag = 'smem constant byte address 0x4 - core index']
  #allocation1 [shape = 'u32[72,128]{1,0:T(1,128)}', space=vmem, size = 0x9000, scoped, tag = 'internal scratch']
  %s0 = inlined_call_operand.vmem [shape: f32[128,128], index: 0, kind: input, shape index: {}]
  %s1 = inlined_call_operand.vmem [shape: f32[1,128], index: 1, kind: input, shape index: {}]
  %s2 = inlined_call_operand.vmem [shape: f32[1,128], index: 2, kind: input, shape index: {}]
  %s3 = inlined_call_operand.vmem [shape: bf16[128,128], index: 3, kind: output, shape index: {}]
  %s4 = sld [smem:[#allocation0]]
  $region45: #{basic_block_forward.6} parent=0
    _
  %s6 = ssub.s32 1, %s4
  %s7 = scalar_select 0, %s6, %s4
  loop: start=0, step=1, limit=4
  $region2: #{basic_block_forward.6} parent=0 // loop_pre_header
    _
  $region3: #{basic_block_forward.6} parent=0 // loop_header
    %s9 = sphi 0, %s13
    %p10 = scmp.ge.s32.totalorder %s9, 4
    %s19 = sphi 0, %s21
    %s22 = sphi 0, %s19
    %s23 = sphi 0, %s22
    %s39 = sphi 0, %s23
    %s43 = sphi 0, %s43
    %s45 = sphi 0, %s43
    %s46 = sphi 0, %s45
    %s60 = sphi 0, %s46
    %s64 = sphi 0, %s64
    %s66 = sphi 0, %s64
    %s67 = sphi 0, %s66
    %s81 = sphi 0, %s67
    %s87 = sphi 0, %s89
    %s90 = sphi 0, %s87
    %s91 = sphi 0, %s90
    %s107 = sphi 0, %s91
  $region4: #{basic_block_forward.6} parent=0 // loop_header_branch
    %12 = sbr.rel (%p10) target = $region8
  $region5: #{basic_block_forward.6} parent=0 // loop_body
    %s14 = ssub.s32 %s9, 1
    %s15 = ssub.s32 %s9, 2
    %s16 = sadd.s32 %s9, 1
    %s17 = ssub.s32 %s9, %s16
    %p18 = scmp.eq.s32.totalorder %s17, 0
    %s20 = sadd.s32 %s19, 1
    %s21 = scalar_select %p18, %s19, %s20
    %p24 = pneg %p18
    %p25 = scmp.eq.s32.totalorder %s9, 1
    %p26 = por %p24, %p25
    %p27 = scmp.ne.s32.totalorder %s19, %s22
    %p28 = scmp.eq.s32.totalorder %s9, 0
    %p29 = por %p27, %p28
    %p30 = scmp.ne.s32.totalorder %s19, %s22
    %p31 = scmp.eq.s32.totalorder %s14, 1
    %p32 = por %p30, %p31
    %p33 = scmp.ne.s32.totalorder %s22, %s23
    %p34 = scmp.eq.s32.totalorder %s14, 0
    %p35 = por %p33, %p34
    %p36 = scmp.ne.s32.totalorder %s22, %s23
    %p37 = scmp.eq.s32.totalorder %s15, 1
    %p38 = por %p36, %p37
    %p40 = scmp.ne.s32.totalorder %s23, %s39
    %p41 = scmp.eq.s32.totalorder %s15, 0
    %p42 = por %p40, %p41
    %s44 = sadd.s32 %s43, 1
    %p47 = scmp.eq.s32.totalorder %s9, 1
    %p48 = scmp.ne.s32.totalorder %s43, %s45
    %p49 = scmp.eq.s32.totalorder %s9, 0
    %p50 = por %p48, %p49
    %p51 = scmp.ne.s32.totalorder %s43, %s45
    %p52 = scmp.eq.s32.totalorder %s14, 1
    %p53 = por %p51, %p52
    %p54 = scmp.ne.s32.totalorder %s45, %s46
    %p55 = scmp.eq.s32.totalorder %s14, 0
    %p56 = por %p54, %p55
    %p57 = scmp.ne.s32.totalorder %s45, %s46
    %p58 = scmp.eq.s32.totalorder %s15, 1
    %p59 = por %p57, %p58
    %p61 = scmp.ne.s32.totalorder %s46, %s60
    %p62 = scmp.eq.s32.totalorder %s15, 0
    %p63 = por %p61, %p62
    %s65 = sadd.s32 %s64, 1
    %p68 = scmp.eq.s32.totalorder %s9, 1
    %p69 = scmp.ne.s32.totalorder %s64, %s66
    %p70 = scmp.eq.s32.totalorder %s9, 0
    %p71 = por %p69, %p70
    %p72 = scmp.ne.s32.totalorder %s64, %s66
    %p73 = scmp.eq.s32.totalorder %s14, 1
    %p74 = por %p72, %p73
    %p75 = scmp.ne.s32.totalorder %s66, %s67
    %p76 = scmp.eq.s32.totalorder %s14, 0
    %p77 = por %p75, %p76
    %p78 = scmp.ne.s32.totalorder %s66, %s67
    %p79 = scmp.eq.s32.totalorder %s15, 1
    %p80 = por %p78, %p79
    %p82 = scmp.ne.s32.totalorder %s67, %s81
    %p83 = scmp.eq.s32.totalorder %s15, 0
    %p84 = por %p82, %p83
    %s85 = ssub.s32 %s9, %s16
    %p86 = scmp.eq.s32.totalorder %s85, 0
    %s88 = sadd.s32 %s87, 1
    %s89 = scalar_select %p86, %s87, %s88
    %p92 = pneg %p86
    %p93 = scmp.eq.s32.totalorder %s9, 1
    %p94 = por %p92, %p93
    %p95 = scmp.ne.s32.totalorder %s87, %s90
    %p96 = scmp.eq.s32.totalorder %s9, 0
    %p97 = por %p95, %p96
    %p98 = scmp.ne.s32.totalorder %s87, %s90
    %p99 = scmp.eq.s32.totalorder %s14, 1
    %p100 = por %p98, %p99
    %p101 = scmp.ne.s32.totalorder %s90, %s91
    %p102 = scmp.eq.s32.totalorder %s14, 0
    %p103 = por %p101, %p102
    %p104 = scmp.ne.s32.totalorder %s90, %s91
    %p105 = scmp.eq.s32.totalorder %s15, 1
    %p106 = por %p104, %p105
    %p108 = scmp.ne.s32.totalorder %s91, %s107
    %p109 = scmp.eq.s32.totalorder %s15, 0
    %p110 = por %p108, %p109
    %p111 = scmp.le.s32.totalorder 1, %s9
    %p112 = scmp.lt.s32.totalorder %s9, 3
    %p113 = pnand %p111, %p112
    %p114 = pneg %p113
    // Predicated region
    $region9: #{basic_block_forward.6} parent=5 // pred_check
      _
    $region10: #{basic_block_forward.6} parent=5 // pred_check_branch
      %116 = sbr.rel (%p113) target = $region12
    $region11: #{basic_block_forward.6} parent=5 // pred_region
      %s117 = ssub.s32 %s9, 1
      // Predicated region
      $region13: #{basic_block_forward.6} parent=11 // pred_check
        %p118 = pneg %p56
      $region14: #{basic_block_forward.6} parent=11 // pred_check_branch
        %120 = sbr.rel (%p118) target = $region16
      $region15: #{basic_block_forward.6} parent=11 // pred_region
        _
      $region16: #{basic_block_forward.6} parent=11 // pred_fallthru
        _
      // Predicated region
      $region17: #{basic_block_forward.6} parent=11 // pred_check
        %p121 = pneg %p77
      $region18: #{basic_block_forward.6} parent=11 // pred_check_branch
        %123 = sbr.rel (%p121) target = $region20
      $region19: #{basic_block_forward.6} parent=11 // pred_region
        _
      $region20: #{basic_block_forward.6} parent=11 // pred_fallthru
        _
    $region12: #{basic_block_forward.6} parent=5 // pred_fallthru
      _
    %p124 = scmp.lt.s32.totalorder %s9, 2
    // Predicated region
    $region21: #{basic_block_forward.6} parent=5 // pred_check
      %p125 = pneg %p124
    $region22: #{basic_block_forward.6} parent=5 // pred_check_branch
      %127 = sbr.rel (%p125) target = $region24
    $region23: #{basic_block_forward.6} parent=5 // pred_region
      // Predicated region
      $region25: #{basic_block_forward.6} parent=23 // pred_check
        %p128 = pneg %p29
      $region26: #{basic_block_forward.6} parent=23 // pred_check_branch
        %130 = sbr.rel (%p128) target = $region28
      $region27: #{basic_block_forward.6} parent=23 // pred_region
        %s131 = smul.u32 8, %s9
        %p132 = scmp.lt.s32.totalorder %s131, 15
        %s133 = scalar_select %p132, %s131, 15
        %s134 = smul.addr %s133, 8
        %s135 = scalar_lea.vmem %s0, %s134
        %s136 = smul.u32 8, %s9
      $region28: #{basic_block_forward.6} parent=23 // pred_fallthru
        _
    $region24: #{basic_block_forward.6} parent=5 // pred_fallthru
      _
    %p137 = scmp.le.s32.totalorder 1, %s9
    %p138 = scmp.lt.s32.totalorder %s9, 3
    %p139 = pnand %p137, %p138
    %p140 = pneg %p139
    // Predicated region
    $region29: #{basic_block_forward.6} parent=5 // pred_check
      _
    $region30: #{basic_block_forward.6} parent=5 // pred_check_branch
      %142 = sbr.rel (%p139) target = $region32
    $region31: #{basic_block_forward.6} parent=5 // pred_region
      %s143 = ssub.s32 %s9, 1
      %s144 = smul.u32 8, %s14
      %p145 = scmp.lt.s32.totalorder %s144, 15
      %s146 = scalar_select %p145, %s144, 15
      %s147 = smul.addr %s146, 8
      %s148 = scalar_lea.vmem %s0, %s147
      %p149 = pneg %p35
      %p150 = pneg %p32
      %p151 = pneg %p56
      %p152 = pneg %p53
      %p153 = pneg %p77
      %p154 = pneg %p74
      %p155 = pneg %p103
      %p156 = pneg %p100
      %s157 = smul.u32 8, %s14
      %p158 = scmp.lt.s32.totalorder %s157, 15
      %s159 = scalar_select %p158, %s157, 15
      %s160 = smul.addr %s159, 4
      %s161 = scalar_lea.vmem %s3, %s160
      %s162 = smul.u32 8, %s14
      %p163 = scmp.lt.s32.totalorder %s162, 15
      %s164 = scalar_select %p163, %s162, 15
      %s165 = smul.addr %s164, 8
      %s166 = scalar_lea.vmem %s0, %s165
      %s167 = smul.u32 8, %s14
      %s168 = smul.u32 8, %s14
      %p169 = scmp.lt.s32.totalorder %s168, 15
      %s170 = scalar_select %p169, %s168, 15
      %s171 = smul.addr %s170, 4
      %s172 = scalar_lea.vmem %s3, %s171
      %s173 = smul.u32 8, %s14
      %v174 = vld [vmem:[%s166] sm:$0xff]
      %v175 = vld [vmem:[%s166 + $0x8] sm:$0xff]
      %v176 = vld [vmem:[%s166 + $0x10] sm:$0xff]
      %v177 = vld [vmem:[%s166 + $0x18] sm:$0xff]
      %v178 = vld [vmem:[%s166 + $0x20] sm:$0xff]
      %v179 = vld [vmem:[%s166 + $0x28] sm:$0xff]
      %v180 = vld [vmem:[%s166 + $0x30] sm:$0xff]
      %v181 = vld [vmem:[%s166 + $0x38] sm:$0xff]
      %v182 = vld [vmem:[%s1] sm:$0x1]
      %v184 = vperm.slane %v182, 0
      %v186 = vmul.f32 %v174, %v184
      %v187 = vmul.f32 %v175, %v184
      %v188 = vmul.f32 %v176, %v184
      %v189 = vmul.f32 %v177, %v184
      %v190 = vmul.f32 %v178, %v184
      %v191 = vmul.f32 %v179, %v184
      %v192 = vmul.f32 %v180, %v184
      %v193 = vmul.f32 %v181, %v184
      %v194 = vld [vmem:[%s2] sm:$0x1]
      %v196 = vperm.slane %v194, 0
      %v198 = vadd.f32 %v186, %v196
      %v199 = vadd.f32 %v187, %v196
      %v200 = vadd.f32 %v188, %v196
      %v201 = vadd.f32 %v189, %v196
      %v202 = vadd.f32 %v190, %v196
      %v203 = vadd.f32 %v191, %v196
      %v204 = vadd.f32 %v192, %v196
      %v205 = vadd.f32 %v193, %v196
      %v206 = vmax.f32 %v198, 0.0
      %v207 = vmax.f32 %v199, 0.0
      %v208 = vmax.f32 %v200, 0.0
      %v209 = vmax.f32 %v201, 0.0
      %v210 = vmax.f32 %v202, 0.0
      %v211 = vmax.f32 %v203, 0.0
      %v212 = vmax.f32 %v204, 0.0
      %v213 = vmax.f32 %v205, 0.0
      %v214 = vpack.c.bf16 %v206, %v206
      %v215 = vpack.c.bf16 %v207, %v207
      %v216 = vpack.c.bf16 %v208, %v208
      %v217 = vpack.c.bf16 %v209, %v209
      %v218 = vpack.c.bf16 %v210, %v210
      %v219 = vpack.c.bf16 %v211, %v211
      %v220 = vpack.c.bf16 %v212, %v212
      %v221 = vpack.c.bf16 %v213, %v213
      %222 = vst [vmem:[%s172] sm:$0xf] %v214
      %223 = vst [vmem:[%s172 + $0x4] sm:$0xf] %v215
      %224 = vst [vmem:[%s172 + $0x8] sm:$0xf] %v216
      %225 = vst [vmem:[%s172 + $0xc] sm:$0xf] %v217
      %226 = vst [vmem:[%s172 + $0x10] sm:$0xf] %v218
      %227 = vst [vmem:[%s172 + $0x14] sm:$0xf] %v219
      %228 = vst [vmem:[%s172 + $0x18] sm:$0xf] %v220
      %229 = vst [vmem:[%s172 + $0x1c] sm:$0xf] %v221
      %s230 = smul.u32 8, %s14
      %p231 = scmp.lt.s32.totalorder %s230, 15
      %s232 = scalar_select %p231, %s230, 15
      %s233 = smul.addr %s232, 4
      %s234 = scalar_lea.vmem %s3, %s233
      // Predicated region
      $region33: #{basic_block_forward.6} parent=31 // pred_check
        %p235 = pneg %p100
      $region34: #{basic_block_forward.6} parent=31 // pred_check_branch
        %237 = sbr.rel (%p235) target = $region36
      $region35: #{basic_block_forward.6} parent=31 // pred_region
        %s238 = smul.u32 8, %s14
      $region36: #{basic_block_forward.6} parent=31 // pred_fallthru
        _
    $region32: #{basic_block_forward.6} parent=5 // pred_fallthru
      _
    %p239 = scmp.le.s32.totalorder 2, %s9
    // Predicated region
    $region37: #{basic_block_forward.6} parent=5 // pred_check
      %p240 = pneg %p239
    $region38: #{basic_block_forward.6} parent=5 // pred_check_branch
      %242 = sbr.rel (%p240) target = $region40
    $region39: #{basic_block_forward.6} parent=5 // pred_region
      %s243 = ssub.s32 %s9, 2
      // Predicated region
      $region41: #{basic_block_forward.6} parent=39 // pred_check
        %p244 = pneg %p106
      $region42: #{basic_block_forward.6} parent=39 // pred_check_branch
        %246 = sbr.rel (%p244) target = $region44
      $region43: #{basic_block_forward.6} parent=39 // pred_region
        %s247 = smul.u32 8, %s15
        %p248 = scmp.lt.s32.totalorder %s247, 15
        %s249 = scalar_select %p248, %s247, 15
        %s250 = smul.addr %s249, 4
        %s251 = scalar_lea.vmem %s3, %s250
      $region44: #{basic_block_forward.6} parent=39 // pred_fallthru
        _
    $region40: #{basic_block_forward.6} parent=5 // pred_fallthru
      _
  $region6: #{basic_block_forward.6} parent=0 // loop_footer
    %s13 = sadd.s32 1, %s9
  $region7: #{basic_block_forward.6} parent=0 // loop_footer_branch
    %8 = sbr.rel target = $region3
  $region8: #{basic_block_forward.6} parent=0 // loop_exit
    _

// kernel: basic_block_forward.5
$region0: #{basic_block_forward.5}
  #allocation0 [shape = 'u32[]', space=smem, size = 0x4, offset = 0x4, fixed_abs, tag = 'smem constant byte address 0x4 - core index']
  #allocation1 [shape = 'u32[72,128]{1,0:T(1,128)}', space=vmem, size = 0x9000, scoped, tag = 'internal scratch']
  %s0 = inlined_call_operand.vmem [shape: bf16[128,36], index: 0, kind: input, shape index: {}]
  %s1 = inlined_call_operand.vmem [shape: bf16[36,128], index: 1, kind: input, shape index: {}]
  %s2 = inlined_call_operand.vmem [shape: f32[128,128], index: 2, kind: output, shape index: {0}]
  %s3 = inlined_call_operand.vmem [shape: f32[1,128], index: 3, kind: output, shape index: {1}]
  %s4 = inlined_call_operand.vmem [shape: f32[1,128], index: 4, kind: output, shape index: {2}]
  %5 = xla_tuple %s2, %s3, %s4
  %s6 = sld [smem:[#allocation0]]
  $region61: #{basic_block_forward.5} parent=0
    _
  %s8 = ssub.s32 1, %s6
  %s9 = scalar_select 0, %s8, %s6
  loop: start=0, step=1, limit=4
  $region2: #{basic_block_forward.5} parent=0 // loop_pre_header
    _
  $region3: #{basic_block_forward.5} parent=0 // loop_header
    %s11 = sphi 0, %s15
    %p12 = scmp.ge.s32.totalorder %s11, 4
    %s21 = sphi 0, %s23
    %s24 = sphi 0, %s21
    %s25 = sphi 0, %s24
    %s41 = sphi 0, %s25
    %s45 = sphi 0, %s45
    %s47 = sphi 0, %s45
    %s48 = sphi 0, %s47
    %s62 = sphi 0, %s48
    %s68 = sphi 0, %s70
    %s71 = sphi 0, %s68
    %s72 = sphi 0, %s71
    %s88 = sphi 0, %s72
    %s92 = sphi 0, %s92
    %s94 = sphi 0, %s92
    %s95 = sphi 0, %s94
    %s109 = sphi 0, %s95
    %s113 = sphi 0, %s113
    %s115 = sphi 0, %s113
    %s116 = sphi 0, %s115
    %s130 = sphi 0, %s116
  $region4: #{basic_block_forward.5} parent=0 // loop_header_branch
    %14 = sbr.rel (%p12) target = $region8
  $region5: #{basic_block_forward.5} parent=0 // loop_body
    %s16 = ssub.s32 %s11, 1
    %s17 = ssub.s32 %s11, 2
    %s18 = sadd.s32 %s11, 1
    %s19 = ssub.s32 %s11, %s18
    %p20 = scmp.eq.s32.totalorder %s19, 0
    %s22 = sadd.s32 %s21, 1
    %s23 = scalar_select %p20, %s21, %s22
    %p26 = pneg %p20
    %p27 = scmp.eq.s32.totalorder %s11, 1
    %p28 = por %p26, %p27
    %p29 = scmp.ne.s32.totalorder %s21, %s24
    %p30 = scmp.eq.s32.totalorder %s11, 0
    %p31 = por %p29, %p30
    %p32 = scmp.ne.s32.totalorder %s21, %s24
    %p33 = scmp.eq.s32.totalorder %s16, 1
    %p34 = por %p32, %p33
    %p35 = scmp.ne.s32.totalorder %s24, %s25
    %p36 = scmp.eq.s32.totalorder %s16, 0
    %p37 = por %p35, %p36
    %p38 = scmp.ne.s32.totalorder %s24, %s25
    %p39 = scmp.eq.s32.totalorder %s17, 1
    %p40 = por %p38, %p39
    %p42 = scmp.ne.s32.totalorder %s25, %s41
    %p43 = scmp.eq.s32.totalorder %s17, 0
    %p44 = por %p42, %p43
    %s46 = sadd.s32 %s45, 1
    %p49 = scmp.eq.s32.totalorder %s11, 1
    %p50 = scmp.ne.s32.totalorder %s45, %s47
    %p51 = scmp.eq.s32.totalorder %s11, 0
    %p52 = por %p50, %p51
    %p53 = scmp.ne.s32.totalorder %s45, %s47
    %p54 = scmp.eq.s32.totalorder %s16, 1
    %p55 = por %p53, %p54
    %p56 = scmp.ne.s32.totalorder %s47, %s48
    %p57 = scmp.eq.s32.totalorder %s16, 0
    %p58 = por %p56, %p57
    %p59 = scmp.ne.s32.totalorder %s47, %s48
    %p60 = scmp.eq.s32.totalorder %s17, 1
    %p61 = por %p59, %p60
    %p63 = scmp.ne.s32.totalorder %s48, %s62
    %p64 = scmp.eq.s32.totalorder %s17, 0
    %p65 = por %p63, %p64
    %s66 = ssub.s32 %s11, %s18
    %p67 = scmp.eq.s32.totalorder %s66, 0
    %s69 = sadd.s32 %s68, 1
    %s70 = scalar_select %p67, %s68, %s69
    %p73 = pneg %p67
    %p74 = scmp.eq.s32.totalorder %s11, 1
    %p75 = por %p73, %p74
    %p76 = scmp.ne.s32.totalorder %s68, %s71
    %p77 = scmp.eq.s32.totalorder %s11, 0
    %p78 = por %p76, %p77
    %p79 = scmp.ne.s32.totalorder %s68, %s71
    %p80 = scmp.eq.s32.totalorder %s16, 1
    %p81 = por %p79, %p80
    %p82 = scmp.ne.s32.totalorder %s71, %s72
    %p83 = scmp.eq.s32.totalorder %s16, 0
    %p84 = por %p82, %p83
    %p85 = scmp.ne.s32.totalorder %s71, %s72
    %p86 = scmp.eq.s32.totalorder %s17, 1
    %p87 = por %p85, %p86
    %p89 = scmp.ne.s32.totalorder %s72, %s88
    %p90 = scmp.eq.s32.totalorder %s17, 0
    %p91 = por %p89, %p90
    %s93 = sadd.s32 %s92, 1
    %p96 = scmp.eq.s32.totalorder %s11, 1
    %p97 = scmp.ne.s32.totalorder %s92, %s94
    %p98 = scmp.eq.s32.totalorder %s11, 0
    %p99 = por %p97, %p98
    %p100 = scmp.ne.s32.totalorder %s92, %s94
    %p101 = scmp.eq.s32.totalorder %s16, 1
    %p102 = por %p100, %p101
    %p103 = scmp.ne.s32.totalorder %s94, %s95
    %p104 = scmp.eq.s32.totalorder %s16, 0
    %p105 = por %p103, %p104
    %p106 = scmp.ne.s32.totalorder %s94, %s95
    %p107 = scmp.eq.s32.totalorder %s17, 1
    %p108 = por %p106, %p107
    %p110 = scmp.ne.s32.totalorder %s95, %s109
    %p111 = scmp.eq.s32.totalorder %s17, 0
    %p112 = por %p110, %p111
    %s114 = sadd.s32 %s113, 1
    %p117 = scmp.eq.s32.totalorder %s11, 1
    %p118 = scmp.ne.s32.totalorder %s113, %s115
    %p119 = scmp.eq.s32.totalorder %s11, 0
    %p120 = por %p118, %p119
    %p121 = scmp.ne.s32.totalorder %s113, %s115
    %p122 = scmp.eq.s32.totalorder %s16, 1
    %p123 = por %p121, %p122
    %p124 = scmp.ne.s32.totalorder %s115, %s116
    %p125 = scmp.eq.s32.totalorder %s16, 0
    %p126 = por %p124, %p125
    %p127 = scmp.ne.s32.totalorder %s115, %s116
    %p128 = scmp.eq.s32.totalorder %s17, 1
    %p129 = por %p127, %p128
    %p131 = scmp.ne.s32.totalorder %s116, %s130
    %p132 = scmp.eq.s32.totalorder %s17, 0
    %p133 = por %p131, %p132
    %p134 = scmp.le.s32.totalorder 1, %s11
    %p135 = scmp.lt.s32.totalorder %s11, 3
    %p136 = pnand %p134, %p135
    %p137 = pneg %p136
    // Predicated region
    $region9: #{basic_block_forward.5} parent=5 // pred_check
      _
    $region10: #{basic_block_forward.5} parent=5 // pred_check_branch
      %139 = sbr.rel (%p136) target = $region12
    $region11: #{basic_block_forward.5} parent=5 // pred_region
      %s140 = ssub.s32 %s11, 1
      // Predicated region
      $region13: #{basic_block_forward.5} parent=11 // pred_check
        %p141 = pneg %p58
      $region14: #{basic_block_forward.5} parent=11 // pred_check_branch
        %143 = sbr.rel (%p141) target = $region16
      $region15: #{basic_block_forward.5} parent=11 // pred_region
        _
      $region16: #{basic_block_forward.5} parent=11 // pred_fallthru
        _
    $region12: #{basic_block_forward.5} parent=5 // pred_fallthru
      _
    %p144 = scmp.lt.s32.totalorder %s11, 2
    // Predicated region
    $region17: #{basic_block_forward.5} parent=5 // pred_check
      %p145 = pneg %p144
    $region18: #{basic_block_forward.5} parent=5 // pred_check_branch
      %147 = sbr.rel (%p145) target = $region20
    $region19: #{basic_block_forward.5} parent=5 // pred_region
      // Predicated region
      $region21: #{basic_block_forward.5} parent=19 // pred_check
        %p148 = pneg %p31
      $region22: #{basic_block_forward.5} parent=19 // pred_check_branch
        %150 = sbr.rel (%p148) target = $region24
      $region23: #{basic_block_forward.5} parent=19 // pred_region
        %s151 = smul.u32 8, %s11
        %p152 = scmp.lt.s32.totalorder %s151, 15
        %s153 = scalar_select %p152, %s151, 15
        %s154 = smul.addr %s153, 4
        %s155 = scalar_lea.vmem %s0, %s154
        %s156 = smul.u32 8, %s11
      $region24: #{basic_block_forward.5} parent=19 // pred_fallthru
        _
    $region20: #{basic_block_forward.5} parent=5 // pred_fallthru
      _
    %p157 = scmp.le.s32.totalorder 1, %s11
    %p158 = scmp.lt.s32.totalorder %s11, 3
    %p159 = pnand %p157, %p158
    %p160 = pneg %p159
    // Predicated region
    $region25: #{basic_block_forward.5} parent=5 // pred_check
      _
    $region26: #{basic_block_forward.5} parent=5 // pred_check_branch
      %162 = sbr.rel (%p159) target = $region28
    $region27: #{basic_block_forward.5} parent=5 // pred_region
      %s163 = ssub.s32 %s11, 1
      %s164 = smul.u32 8, %s16
      %p165 = scmp.lt.s32.totalorder %s164, 15
      %s166 = scalar_select %p165, %s164, 15
      %s167 = smul.addr %s166, 4
      %s168 = scalar_lea.vmem %s0, %s167
      %p169 = pneg %p37
      %p170 = pneg %p34
      %p171 = pneg %p58
      %p172 = pneg %p55
      %p173 = pneg %p84
      %p174 = pneg %p81
      %s175 = smul.u32 8, %s16
      %p176 = scmp.lt.s32.totalorder %s175, 15
      %s177 = scalar_select %p176, %s175, 15
      %s178 = smul.addr %s177, 8
      %s179 = scalar_lea.vmem %s2, %s178
      %p180 = pneg %p105
      %p181 = pneg %p102
      %p182 = pneg %p126
      %p183 = pneg %p123
      %s184 = smul.u32 8, %s16
      %p185 = scmp.lt.s32.totalorder %s184, 15
      %s186 = scalar_select %p185, %s184, 15
      %s187 = smul.addr %s186, 4
      %s188 = scalar_lea.vmem %s0, %s187
      %s189 = smul.u32 8, %s16
      %s190 = smul.u32 8, %s16
      %p191 = scmp.lt.s32.totalorder %s190, 15
      %s192 = scalar_select %p191, %s190, 15
      %s193 = smul.addr %s192, 8
      %s194 = scalar_lea.vmem %s2, %s193
      %s195 = smul.u32 8, %s16
      %p197 = scmp.eq.s32.totalorder %s16, 0
      // Predicated region
      $region29: #{basic_block_forward.5} parent=27 // pred_check
        %p198 = pneg %p197
      $region30: #{basic_block_forward.5} parent=27 // pred_check_branch
        %200 = sbr.rel (%p198) target = $region32
      $region31: #{basic_block_forward.5} parent=27 // pred_region
        %201 = vst [vmem:[%s3] sm:$0x1] 0.0
        %202 = vst [vmem:[%s4] sm:$0x1] 0.0
      $region32: #{basic_block_forward.5} parent=27 // pred_fallthru
        _
      %v203 = vld [vmem:[%s188] sm:$0xf]
      %v204 = vld [vmem:[%s188 + $0x4] sm:$0xf]
      %v205 = vld [vmem:[%s188 + $0x8] sm:$0xf]
      %v206 = vld [vmem:[%s188 + $0xc] sm:$0xf]
      %v207 = vld [vmem:[%s188 + $0x10] sm:$0xf]
      %v208 = vld [vmem:[%s188 + $0x14] sm:$0xf]
      %v209 = vld [vmem:[%s188 + $0x18] sm:$0xf]
      %v210 = vld [vmem:[%s188 + $0x1c] sm:$0xf]
      %v211 = vld [vmem:[%s1] sm:$0xf]
      %v212 = vld [vmem:[%s1 + $0x4] sm:$0xf]
      %v213 = vld [vmem:[%s1 + $0x8] sm:$0xf]
      %v214 = vld [vmem:[%s1 + $0xc] sm:$0xf]
      %v215 = vld [vmem:[%s1 + $0x10] sm:$0x3]
      %v224 = vunpack.c.l.b16 %v203
      %v225 = vunpack.c.l.b16 %v204
      %v226 = vunpack.c.l.b16 %v205
      %v227 = vunpack.c.l.b16 %v206
      %v228 = vunpack.c.l.b16 %v207
      %v229 = vunpack.c.l.b16 %v208
      %v230 = vunpack.c.l.b16 %v209
      %v231 = vunpack.c.l.b16 %v210
      %v232 = vpack.c.b16 %v225, %v224
      %v233 = vpack.c.b16 %v227, %v226
      %v234 = vpack.c.b16 %v229, %v228
      %v235 = vpack.c.b16 %v231, %v230
      %v241 = vunpack.c.l.b16 %v211
      %v242 = vunpack.c.l.b16 %v212
      %v243 = vunpack.c.l.b16 %v213
      %v244 = vunpack.c.l.b16 %v214
      %v245 = vunpack.c.l.b16 %v215
      %v246 = vpack.c.b16 %v242, %v241
      %v247 = vpack.c.b16 %v244, %v243
      %v248 = vpack.c.b16 %v245, %v245
      %vm251 = vcmask 293888
      %v253 = vsel %vm251, %v232, 0
      %v256 = vsel %vm251, %v233, 0
      %v259 = vsel %vm251, %v234, 0
      %v262 = vsel %vm251, %v235, 0
      %vm264 = vcmask 1041408
      %v266 = vsel %vm264, %v248, 0
      %268 = vmatpush.bf16.msra.mxu0 0
      %269 = vmatpush.bf16.msra.mxu0 0
      %270 = vmatpush.bf16.msra.mxu0 0
      %271 = vmatpush.bf16.msra.mxu0 0
      %272 = vmatpush.bf16.msra.mxu0 0
      %273 = vmatpush.bf16.msra.mxu0 %v266
      %274 = vmatpush.bf16.msra.mxu0 %v247
      %275 = vmatpush.bf16.msra.mxu0 %v246
      %276 = vmatmul.bf16.gmra.mxu0 %v253
      %v277 = vpop.f32.mrf.mxu0
      %v278 = vadd.f32 0.0, %v277
      %v279 = vpop.f32.mrf.mxu0
      %v280 = vadd.f32 0.0, %v279
      %281 = vmatmul.bf16.gmra.mxu0 %v256
      %v282 = vpop.f32.mrf.mxu0
      %v283 = vadd.f32 0.0, %v282
      %v284 = vpop.f32.mrf.mxu0
      %v285 = vadd.f32 0.0, %v284
      %286 = vmatmul.bf16.gmra.mxu0 %v259
      %v287 = vpop.f32.mrf.mxu0
      %v288 = vadd.f32 0.0, %v287
      %v289 = vpop.f32.mrf.mxu0
      %v290 = vadd.f32 0.0, %v289
      %291 = vmatmul.bf16.gmra.mxu0 %v262
      %v292 = vpop.f32.mrf.mxu0
      %v293 = vadd.f32 0.0, %v292
      %v294 = vpop.f32.mrf.mxu0
      %v295 = vadd.f32 0.0, %v294
      %296 = vdwg.mxu0
      %297 = vst [vmem:[%s194] sm:$0xff] %v278
      %298 = vst [vmem:[%s194 + $0x8] sm:$0xff] %v280
      %299 = vst [vmem:[%s194 + $0x10] sm:$0xff] %v283
      %300 = vst [vmem:[%s194 + $0x18] sm:$0xff] %v285
      %301 = vst [vmem:[%s194 + $0x20] sm:$0xff] %v288
      %302 = vst [vmem:[%s194 + $0x28] sm:$0xff] %v290
      %303 = vst [vmem:[%s194 + $0x30] sm:$0xff] %v293
      %304 = vst [vmem:[%s194 + $0x38] sm:$0xff] %v295
      %v305 = vld [vmem:[%s3] sm:$0x1]
      %v306 = vadd.f32 %v278, %v280
      %v307 = vadd.f32 %v306, %v283
      %v308 = vadd.f32 %v307, %v285
      %v309 = vadd.f32 %v308, %v288
      %v310 = vadd.f32 %v309, %v290
      %v311 = vadd.f32 %v310, %v293
      %v312 = vadd.f32 %v311, %v295
      %v313 = vrot.slane %v312, 4
      %v314 = vadd.f32 %v312, %v313
      %v315 = vrot.slane %v314, 2
      %v316 = vadd.f32 %v314, %v315
      %v317 = vrot.slane %v316, 1
      %v318 = vadd.f32 %v316, %v317
      %v319 = vadd.f32 %v305, %v318
      %320 = vst [vmem:[%s3] sm:$0x1] %v319
      %v321 = vld [vmem:[%s4] sm:$0x1]
      %v322 = vmul.f32 %v278, %v278
      %v323 = vmul.f32 %v280, %v280
      %v324 = vmul.f32 %v283, %v283
      %v325 = vmul.f32 %v285, %v285
      %v326 = vmul.f32 %v288, %v288
      %v327 = vmul.f32 %v290, %v290
      %v328 = vmul.f32 %v293, %v293
      %v329 = vmul.f32 %v295, %v295
      %v330 = vadd.f32 %v322, %v323
      %v331 = vadd.f32 %v330, %v324
      %v332 = vadd.f32 %v331, %v325
      %v333 = vadd.f32 %v332, %v326
      %v334 = vadd.f32 %v333, %v327
      %v335 = vadd.f32 %v334, %v328
      %v336 = vadd.f32 %v335, %v329
      %v337 = vrot.slane %v336, 4
      %v338 = vadd.f32 %v336, %v337
      %v339 = vrot.slane %v338, 2
      %v340 = vadd.f32 %v338, %v339
      %v341 = vrot.slane %v340, 1
      %v342 = vadd.f32 %v340, %v341
      %v343 = vadd.f32 %v321, %v342
      %344 = vst [vmem:[%s4] sm:$0x1] %v343
      %s345 = smul.u32 8, %s16
      %p346 = scmp.lt.s32.totalorder %s345, 15
      %s347 = scalar_select %p346, %s345, 15
      %s348 = smul.addr %s347, 8
      %s349 = scalar_lea.vmem %s2, %s348
      // Predicated region
      $region33: #{basic_block_forward.5} parent=27 // pred_check
        %p350 = pneg %p81
      $region34: #{basic_block_forward.5} parent=27 // pred_check_branch
        %352 = sbr.rel (%p350) target = $region36
      $region35: #{basic_block_forward.5} parent=27 // pred_region
        %s353 = smul.u32 8, %s16
      $region36: #{basic_block_forward.5} parent=27 // pred_fallthru
        _
      // Predicated region
      $region37: #{basic_block_forward.5} parent=27 // pred_check
        %p354 = pneg %p102
      $region38: #{basic_block_forward.5} parent=27 // pred_check_branch
        %356 = sbr.rel (%p354) target = $region40
      $region39: #{basic_block_forward.5} parent=27 // pred_region
        _
      $region40: #{basic_block_forward.5} parent=27 // pred_fallthru
        _
      // Predicated region
      $region41: #{basic_block_forward.5} parent=27 // pred_check
        %p357 = pneg %p123
      $region42: #{basic_block_forward.5} parent=27 // pred_check_branch
        %359 = sbr.rel (%p357) target = $region44
      $region43: #{basic_block_forward.5} parent=27 // pred_region
        _
      $region44: #{basic_block_forward.5} parent=27 // pred_fallthru
        _
      // Predicated region
      $region45: #{basic_block_forward.5} parent=27 // pred_check
        %p360 = pneg %p102
      $region46: #{basic_block_forward.5} parent=27 // pred_check_branch
        %362 = sbr.rel (%p360) target = $region48
      $region47: #{basic_block_forward.5} parent=27 // pred_region
        _
      $region48: #{basic_block_forward.5} parent=27 // pred_fallthru
        _
      // Predicated region
      $region49: #{basic_block_forward.5} parent=27 // pred_check
        %p363 = pneg %p123
      $region50: #{basic_block_forward.5} parent=27 // pred_check_branch
        %365 = sbr.rel (%p363) target = $region52
      $region51: #{basic_block_forward.5} parent=27 // pred_region
        _
      $region52: #{basic_block_forward.5} parent=27 // pred_fallthru
        _
    $region28: #{basic_block_forward.5} parent=5 // pred_fallthru
      _
    %p366 = scmp.le.s32.totalorder 2, %s11
    // Predicated region
    $region53: #{basic_block_forward.5} parent=5 // pred_check
      %p367 = pneg %p366
    $region54: #{basic_block_forward.5} parent=5 // pred_check_branch
      %369 = sbr.rel (%p367) target = $region56
    $region55: #{basic_block_forward.5} parent=5 // pred_region
      %s370 = ssub.s32 %s11, 2
      // Predicated region
      $region57: #{basic_block_forward.5} parent=55 // pred_check
        %p371 = pneg %p87
      $region58: #{basic_block_forward.5} parent=55 // pred_check_branch
        %373 = sbr.rel (%p371) target = $region60
      $region59: #{basic_block_forward.5} parent=55 // pred_region
        %s374 = smul.u32 8, %s17
        %p375 = scmp.lt.s32.totalorder %s374, 15
        %s376 = scalar_select %p375, %s374, 15
        %s377 = smul.addr %s376, 8
        %s378 = scalar_lea.vmem %s2, %s377
      $region60: #{basic_block_forward.5} parent=55 // pred_fallthru
        _
    $region56: #{basic_block_forward.5} parent=5 // pred_fallthru
      _
  $region6: #{basic_block_forward.5} parent=0 // loop_footer
    %s15 = sadd.s32 1, %s11
  $region7: #{basic_block_forward.5} parent=0 // loop_footer_branch
    %10 = sbr.rel target = $region3
  $region8: #{basic_block_forward.5} parent=0 // loop_exit
    _

// kernel: basic_block_forward.7
$region0: #{basic_block_forward.7}
  #allocation0 [shape = 'u32[]', space=smem, size = 0x4, offset = 0x4, fixed_abs, tag = 'smem constant byte address 0x4 - core index']
  #allocation1 [shape = 'u32[72,128]{1,0:T(1,128)}', space=vmem, size = 0x9000, scoped, tag = 'internal scratch']
  %s0 = inlined_call_operand.vmem [shape: bf16[128,72], index: 0, kind: input, shape index: {}]
  %s1 = inlined_call_operand.vmem [shape: bf16[72,128], index: 1, kind: input, shape index: {}]
  %s2 = inlined_call_operand.vmem [shape: f32[128,128], index: 2, kind: output, shape index: {0}]
  %s3 = inlined_call_operand.vmem [shape: f32[1,128], index: 3, kind: output, shape index: {1}]
  %s4 = inlined_call_operand.vmem [shape: f32[1,128], index: 4, kind: output, shape index: {2}]
  %5 = xla_tuple %s2, %s3, %s4
  %s6 = sld [smem:[#allocation0]]
  $region61: #{basic_block_forward.7} parent=0
    _
  %s8 = ssub.s32 1, %s6
  %s9 = scalar_select 0, %s8, %s6
  loop: start=0, step=1, limit=4
  $region2: #{basic_block_forward.7} parent=0 // loop_pre_header
    _
  $region3: #{basic_block_forward.7} parent=0 // loop_header
    %s11 = sphi 0, %s15
    %p12 = scmp.ge.s32.totalorder %s11, 4
    %s21 = sphi 0, %s23
    %s24 = sphi 0, %s21
    %s25 = sphi 0, %s24
    %s41 = sphi 0, %s25
    %s45 = sphi 0, %s45
    %s47 = sphi 0, %s45
    %s48 = sphi 0, %s47
    %s62 = sphi 0, %s48
    %s68 = sphi 0, %s70
    %s71 = sphi 0, %s68
    %s72 = sphi 0, %s71
    %s88 = sphi 0, %s72
    %s92 = sphi 0, %s92
    %s94 = sphi 0, %s92
    %s95 = sphi 0, %s94
    %s109 = sphi 0, %s95
    %s113 = sphi 0, %s113
    %s115 = sphi 0, %s113
    %s116 = sphi 0, %s115
    %s130 = sphi 0, %s116
  $region4: #{basic_block_forward.7} parent=0 // loop_header_branch
    %14 = sbr.rel (%p12) target = $region8
  $region5: #{basic_block_forward.7} parent=0 // loop_body
    %s16 = ssub.s32 %s11, 1
    %s17 = ssub.s32 %s11, 2
    %s18 = sadd.s32 %s11, 1
    %s19 = ssub.s32 %s11, %s18
    %p20 = scmp.eq.s32.totalorder %s19, 0
    %s22 = sadd.s32 %s21, 1
    %s23 = scalar_select %p20, %s21, %s22
    %p26 = pneg %p20
    %p27 = scmp.eq.s32.totalorder %s11, 1
    %p28 = por %p26, %p27
    %p29 = scmp.ne.s32.totalorder %s21, %s24
    %p30 = scmp.eq.s32.totalorder %s11, 0
    %p31 = por %p29, %p30
    %p32 = scmp.ne.s32.totalorder %s21, %s24
    %p33 = scmp.eq.s32.totalorder %s16, 1
    %p34 = por %p32, %p33
    %p35 = scmp.ne.s32.totalorder %s24, %s25
    %p36 = scmp.eq.s32.totalorder %s16, 0
    %p37 = por %p35, %p36
    %p38 = scmp.ne.s32.totalorder %s24, %s25
    %p39 = scmp.eq.s32.totalorder %s17, 1
    %p40 = por %p38, %p39
    %p42 = scmp.ne.s32.totalorder %s25, %s41
    %p43 = scmp.eq.s32.totalorder %s17, 0
    %p44 = por %p42, %p43
    %s46 = sadd.s32 %s45, 1
    %p49 = scmp.eq.s32.totalorder %s11, 1
    %p50 = scmp.ne.s32.totalorder %s45, %s47
    %p51 = scmp.eq.s32.totalorder %s11, 0
    %p52 = por %p50, %p51
    %p53 = scmp.ne.s32.totalorder %s45, %s47
    %p54 = scmp.eq.s32.totalorder %s16, 1
    %p55 = por %p53, %p54
    %p56 = scmp.ne.s32.totalorder %s47, %s48
    %p57 = scmp.eq.s32.totalorder %s16, 0
    %p58 = por %p56, %p57
    %p59 = scmp.ne.s32.totalorder %s47, %s48
    %p60 = scmp.eq.s32.totalorder %s17, 1
    %p61 = por %p59, %p60
    %p63 = scmp.ne.s32.totalorder %s48, %s62
    %p64 = scmp.eq.s32.totalorder %s17, 0
    %p65 = por %p63, %p64
    %s66 = ssub.s32 %s11, %s18
    %p67 = scmp.eq.s32.totalorder %s66, 0
    %s69 = sadd.s32 %s68, 1
    %s70 = scalar_select %p67, %s68, %s69
    %p73 = pneg %p67
    %p74 = scmp.eq.s32.totalorder %s11, 1
    %p75 = por %p73, %p74
    %p76 = scmp.ne.s32.totalorder %s68, %s71
    %p77 = scmp.eq.s32.totalorder %s11, 0
    %p78 = por %p76, %p77
    %p79 = scmp.ne.s32.totalorder %s68, %s71
    %p80 = scmp.eq.s32.totalorder %s16, 1
    %p81 = por %p79, %p80
    %p82 = scmp.ne.s32.totalorder %s71, %s72
    %p83 = scmp.eq.s32.totalorder %s16, 0
    %p84 = por %p82, %p83
    %p85 = scmp.ne.s32.totalorder %s71, %s72
    %p86 = scmp.eq.s32.totalorder %s17, 1
    %p87 = por %p85, %p86
    %p89 = scmp.ne.s32.totalorder %s72, %s88
    %p90 = scmp.eq.s32.totalorder %s17, 0
    %p91 = por %p89, %p90
    %s93 = sadd.s32 %s92, 1
    %p96 = scmp.eq.s32.totalorder %s11, 1
    %p97 = scmp.ne.s32.totalorder %s92, %s94
    %p98 = scmp.eq.s32.totalorder %s11, 0
    %p99 = por %p97, %p98
    %p100 = scmp.ne.s32.totalorder %s92, %s94
    %p101 = scmp.eq.s32.totalorder %s16, 1
    %p102 = por %p100, %p101
    %p103 = scmp.ne.s32.totalorder %s94, %s95
    %p104 = scmp.eq.s32.totalorder %s16, 0
    %p105 = por %p103, %p104
    %p106 = scmp.ne.s32.totalorder %s94, %s95
    %p107 = scmp.eq.s32.totalorder %s17, 1
    %p108 = por %p106, %p107
    %p110 = scmp.ne.s32.totalorder %s95, %s109
    %p111 = scmp.eq.s32.totalorder %s17, 0
    %p112 = por %p110, %p111
    %s114 = sadd.s32 %s113, 1
    %p117 = scmp.eq.s32.totalorder %s11, 1
    %p118 = scmp.ne.s32.totalorder %s113, %s115
    %p119 = scmp.eq.s32.totalorder %s11, 0
    %p120 = por %p118, %p119
    %p121 = scmp.ne.s32.totalorder %s113, %s115
    %p122 = scmp.eq.s32.totalorder %s16, 1
    %p123 = por %p121, %p122
    %p124 = scmp.ne.s32.totalorder %s115, %s116
    %p125 = scmp.eq.s32.totalorder %s16, 0
    %p126 = por %p124, %p125
    %p127 = scmp.ne.s32.totalorder %s115, %s116
    %p128 = scmp.eq.s32.totalorder %s17, 1
    %p129 = por %p127, %p128
    %p131 = scmp.ne.s32.totalorder %s116, %s130
    %p132 = scmp.eq.s32.totalorder %s17, 0
    %p133 = por %p131, %p132
    %p134 = scmp.le.s32.totalorder 1, %s11
    %p135 = scmp.lt.s32.totalorder %s11, 3
    %p136 = pnand %p134, %p135
    %p137 = pneg %p136
    // Predicated region
    $region9: #{basic_block_forward.7} parent=5 // pred_check
      _
    $region10: #{basic_block_forward.7} parent=5 // pred_check_branch
      %139 = sbr.rel (%p136) target = $region12
    $region11: #{basic_block_forward.7} parent=5 // pred_region
      %s140 = ssub.s32 %s11, 1
      // Predicated region
      $region13: #{basic_block_forward.7} parent=11 // pred_check
        %p141 = pneg %p58
      $region14: #{basic_block_forward.7} parent=11 // pred_check_branch
        %143 = sbr.rel (%p141) target = $region16
      $region15: #{basic_block_forward.7} parent=11 // pred_region
        _
      $region16: #{basic_block_forward.7} parent=11 // pred_fallthru
        _
    $region12: #{basic_block_forward.7} parent=5 // pred_fallthru
      _
    %p144 = scmp.lt.s32.totalorder %s11, 2
    // Predicated region
    $region17: #{basic_block_forward.7} parent=5 // pred_check
      %p145 = pneg %p144
    $region18: #{basic_block_forward.7} parent=5 // pred_check_branch
      %147 = sbr.rel (%p145) target = $region20
    $region19: #{basic_block_forward.7} parent=5 // pred_region
      // Predicated region
      $region21: #{basic_block_forward.7} parent=19 // pred_check
        %p148 = pneg %p31
      $region22: #{basic_block_forward.7} parent=19 // pred_check_branch
        %150 = sbr.rel (%p148) target = $region24
      $region23: #{basic_block_forward.7} parent=19 // pred_region
        %s151 = smul.u32 8, %s11
        %p152 = scmp.lt.s32.totalorder %s151, 15
        %s153 = scalar_select %p152, %s151, 15
        %s154 = smul.addr %s153, 4
        %s155 = scalar_lea.vmem %s0, %s154
        %s156 = smul.u32 8, %s11
      $region24: #{basic_block_forward.7} parent=19 // pred_fallthru
        _
    $region20: #{basic_block_forward.7} parent=5 // pred_fallthru
      _
    %p157 = scmp.le.s32.totalorder 1, %s11
    %p158 = scmp.lt.s32.totalorder %s11, 3
    %p159 = pnand %p157, %p158
    %p160 = pneg %p159
    // Predicated region
    $region25: #{basic_block_forward.7} parent=5 // pred_check
      _
    $region26: #{basic_block_forward.7} parent=5 // pred_check_branch
      %162 = sbr.rel (%p159) target = $region28
    $region27: #{basic_block_forward.7} parent=5 // pred_region
      %s163 = ssub.s32 %s11, 1
      %s164 = smul.u32 8, %s16
      %p165 = scmp.lt.s32.totalorder %s164, 15
      %s166 = scalar_select %p165, %s164, 15
      %s167 = smul.addr %s166, 4
      %s168 = scalar_lea.vmem %s0, %s167
      %p169 = pneg %p37
      %p170 = pneg %p34
      %p171 = pneg %p58
      %p172 = pneg %p55
      %p173 = pneg %p84
      %p174 = pneg %p81
      %s175 = smul.u32 8, %s16
      %p176 = scmp.lt.s32.totalorder %s175, 15
      %s177 = scalar_select %p176, %s175, 15
      %s178 = smul.addr %s177, 8
      %s179 = scalar_lea.vmem %s2, %s178
      %p180 = pneg %p105
      %p181 = pneg %p102
      %p182 = pneg %p126
      %p183 = pneg %p123
      %s184 = smul.u32 8, %s16
      %p185 = scmp.lt.s32.totalorder %s184, 15
      %s186 = scalar_select %p185, %s184, 15
      %s187 = smul.addr %s186, 4
      %s188 = scalar_lea.vmem %s0, %s187
      %s189 = smul.u32 8, %s16
      %s190 = smul.u32 8, %s16
      %p191 = scmp.lt.s32.totalorder %s190, 15
      %s192 = scalar_select %p191, %s190, 15
      %s193 = smul.addr %s192, 8
      %s194 = scalar_lea.vmem %s2, %s193
      %s195 = smul.u32 8, %s16
      %p197 = scmp.eq.s32.totalorder %s16, 0
      // Predicated region
      $region29: #{basic_block_forward.7} parent=27 // pred_check
        %p198 = pneg %p197
      $region30: #{basic_block_forward.7} parent=27 // pred_check_branch
        %200 = sbr.rel (%p198) target = $region32
      $region31: #{basic_block_forward.7} parent=27 // pred_region
        %201 = vst [vmem:[%s3] sm:$0x1] 0.0
        %202 = vst [vmem:[%s4] sm:$0x1] 0.0
      $region32: #{basic_block_forward.7} parent=27 // pred_fallthru
        _
      %v203 = vld [vmem:[%s188] sm:$0xf]
      %v204 = vld [vmem:[%s188 + $0x4] sm:$0xf]
      %v205 = vld [vmem:[%s188 + $0x8] sm:$0xf]
      %v206 = vld [vmem:[%s188 + $0xc] sm:$0xf]
      %v207 = vld [vmem:[%s188 + $0x10] sm:$0xf]
      %v208 = vld [vmem:[%s188 + $0x14] sm:$0xf]
      %v209 = vld [vmem:[%s188 + $0x18] sm:$0xf]
      %v210 = vld [vmem:[%s188 + $0x1c] sm:$0xf]
      %v211 = vld [vmem:[%s1] sm:$0xf]
      %v212 = vld [vmem:[%s1 + $0x4] sm:$0xf]
      %v213 = vld [vmem:[%s1 + $0x8] sm:$0xf]
      %v214 = vld [vmem:[%s1 + $0xc] sm:$0xf]
      %v215 = vld [vmem:[%s1 + $0x10] sm:$0xf]
      %v216 = vld [vmem:[%s1 + $0x14] sm:$0xf]
      %v217 = vld [vmem:[%s1 + $0x18] sm:$0xf]
      %v218 = vld [vmem:[%s1 + $0x1c] sm:$0xf]
      %v219 = vld [vmem:[%s1 + $0x20] sm:$0xf]
      %v228 = vunpack.c.l.b16 %v203
      %v229 = vunpack.c.l.b16 %v204
      %v230 = vunpack.c.l.b16 %v205
      %v231 = vunpack.c.l.b16 %v206
      %v232 = vunpack.c.l.b16 %v207
      %v233 = vunpack.c.l.b16 %v208
      %v234 = vunpack.c.l.b16 %v209
      %v235 = vunpack.c.l.b16 %v210
      %v236 = vpack.c.b16 %v229, %v228
      %v237 = vpack.c.b16 %v231, %v230
      %v238 = vpack.c.b16 %v233, %v232
      %v239 = vpack.c.b16 %v235, %v234
      %v249 = vunpack.c.l.b16 %v211
      %v250 = vunpack.c.l.b16 %v212
      %v251 = vunpack.c.l.b16 %v213
      %v252 = vunpack.c.l.b16 %v214
      %v253 = vunpack.c.l.b16 %v215
      %v254 = vunpack.c.l.b16 %v216
      %v255 = vunpack.c.l.b16 %v217
      %v256 = vunpack.c.l.b16 %v218
      %v257 = vunpack.c.l.b16 %v219
      %v258 = vpack.c.b16 %v250, %v249
      %v259 = vpack.c.b16 %v252, %v251
      %v260 = vpack.c.b16 %v254, %v253
      %v261 = vpack.c.b16 %v256, %v255
      %v262 = vpack.c.b16 %v257, %v257
      %vm267 = vcmask 588800
      %v269 = vsel %vm267, %v236, 0
      %v272 = vsel %vm267, %v237, 0
      %v275 = vsel %vm267, %v238, 0
      %v278 = vsel %vm267, %v239, 0
      %vm280 = vcmask 1043456
      %v282 = vsel %vm280, %v262, 0
      %284 = vmatpush.bf16.msra.mxu0 0
      %285 = vmatpush.bf16.msra.mxu0 0
      %286 = vmatpush.bf16.msra.mxu0 0
      %287 = vmatpush.bf16.msra.mxu0 %v282
      %288 = vmatpush.bf16.msra.mxu0 %v261
      %289 = vmatpush.bf16.msra.mxu0 %v260
      %290 = vmatpush.bf16.msra.mxu0 %v259
      %291 = vmatpush.bf16.msra.mxu0 %v258
      %292 = vmatmul.bf16.gmra.mxu0 %v269
      %v293 = vpop.f32.mrf.mxu0
      %v294 = vadd.f32 0.0, %v293
      %v295 = vpop.f32.mrf.mxu0
      %v296 = vadd.f32 0.0, %v295
      %297 = vmatmul.bf16.gmra.mxu0 %v272
      %v298 = vpop.f32.mrf.mxu0
      %v299 = vadd.f32 0.0, %v298
      %v300 = vpop.f32.mrf.mxu0
      %v301 = vadd.f32 0.0, %v300
      %302 = vmatmul.bf16.gmra.mxu0 %v275
      %v303 = vpop.f32.mrf.mxu0
      %v304 = vadd.f32 0.0, %v303
      %v305 = vpop.f32.mrf.mxu0
      %v306 = vadd.f32 0.0, %v305
      %307 = vmatmul.bf16.gmra.mxu0 %v278
      %v308 = vpop.f32.mrf.mxu0
      %v309 = vadd.f32 0.0, %v308
      %v310 = vpop.f32.mrf.mxu0
      %v311 = vadd.f32 0.0, %v310
      %312 = vdwg.mxu0
      %313 = vst [vmem:[%s194] sm:$0xff] %v294
      %314 = vst [vmem:[%s194 + $0x8] sm:$0xff] %v296
      %315 = vst [vmem:[%s194 + $0x10] sm:$0xff] %v299
      %316 = vst [vmem:[%s194 + $0x18] sm:$0xff] %v301
      %317 = vst [vmem:[%s194 + $0x20] sm:$0xff] %v304
      %318 = vst [vmem:[%s194 + $0x28] sm:$0xff] %v306
      %319 = vst [vmem:[%s194 + $0x30] sm:$0xff] %v309
      %320 = vst [vmem:[%s194 + $0x38] sm:$0xff] %v311
      %v321 = vld [vmem:[%s3] sm:$0x1]
      %v322 = vadd.f32 %v294, %v296
      %v323 = vadd.f32 %v322, %v299
      %v324 = vadd.f32 %v323, %v301
      %v325 = vadd.f32 %v324, %v304
      %v326 = vadd.f32 %v325, %v306
      %v327 = vadd.f32 %v326, %v309
      %v328 = vadd.f32 %v327, %v311
      %v329 = vrot.slane %v328, 4
      %v330 = vadd.f32 %v328, %v329
      %v331 = vrot.slane %v330, 2
      %v332 = vadd.f32 %v330, %v331
      %v333 = vrot.slane %v332, 1
      %v334 = vadd.f32 %v332, %v333
      %v335 = vadd.f32 %v321, %v334
      %336 = vst [vmem:[%s3] sm:$0x1] %v335
      %v337 = vld [vmem:[%s4] sm:$0x1]
      %v338 = vmul.f32 %v294, %v294
      %v339 = vmul.f32 %v296, %v296
      %v340 = vmul.f32 %v299, %v299
      %v341 = vmul.f32 %v301, %v301
      %v342 = vmul.f32 %v304, %v304
      %v343 = vmul.f32 %v306, %v306
      %v344 = vmul.f32 %v309, %v309
      %v345 = vmul.f32 %v311, %v311
      %v346 = vadd.f32 %v338, %v339
      %v347 = vadd.f32 %v346, %v340
      %v348 = vadd.f32 %v347, %v341
      %v349 = vadd.f32 %v348, %v342
      %v350 = vadd.f32 %v349, %v343
      %v351 = vadd.f32 %v350, %v344
      %v352 = vadd.f32 %v351, %v345
      %v353 = vrot.slane %v352, 4
      %v354 = vadd.f32 %v352, %v353
      %v355 = vrot.slane %v354, 2
      %v356 = vadd.f32 %v354, %v355
      %v357 = vrot.slane %v356, 1
      %v358 = vadd.f32 %v356, %v357
      %v359 = vadd.f32 %v337, %v358
      %360 = vst [vmem:[%s4] sm:$0x1] %v359
      %s361 = smul.u32 8, %s16
      %p362 = scmp.lt.s32.totalorder %s361, 15
      %s363 = scalar_select %p362, %s361, 15
      %s364 = smul.addr %s363, 8
      %s365 = scalar_lea.vmem %s2, %s364
      // Predicated region
      $region33: #{basic_block_forward.7} parent=27 // pred_check
        %p366 = pneg %p81
      $region34: #{basic_block_forward.7} parent=27 // pred_check_branch
        %368 = sbr.rel (%p366) target = $region36
      $region35: #{basic_block_forward.7} parent=27 // pred_region
        %s369 = smul.u32 8, %s16
      $region36: #{basic_block_forward.7} parent=27 // pred_fallthru
        _
      // Predicated region
      $region37: #{basic_block_forward.7} parent=27 // pred_check
        %p370 = pneg %p102
      $region38: #{basic_block_forward.7} parent=27 // pred_check_branch
        %372 = sbr.rel (%p370) target = $region40
      $region39: #{basic_block_forward.7} parent=27 // pred_region
        _
      $region40: #{basic_block_forward.7} parent=27 // pred_fallthru
        _
      // Predicated region
      $region41: #{basic_block_forward.7} parent=27 // pred_check
        %p373 = pneg %p123
      $region42: #{basic_block_forward.7} parent=27 // pred_check_branch
        %375 = sbr.rel (%p373) target = $region44
      $region43: #{basic_block_forward.7} parent=27 // pred_region
        _
      $region44: #{basic_block_forward.7} parent=27 // pred_fallthru
        _
      // Predicated region
      $region45: #{basic_block_forward.7} parent=27 // pred_check
        %p376 = pneg %p102
      $region46: #{basic_block_forward.7} parent=27 // pred_check_branch
        %378 = sbr.rel (%p376) target = $region48
      $region47: #{basic_block_forward.7} parent=27 // pred_region
        _
      $region48: #{basic_block_forward.7} parent=27 // pred_fallthru
        _
      // Predicated region
      $region49: #{basic_block_forward.7} parent=27 // pred_check
        %p379 = pneg %p123
      $region50: #{basic_block_forward.7} parent=27 // pred_check_branch
        %381 = sbr.rel (%p379) target = $region52
      $region51: #{basic_block_forward.7} parent=27 // pred_region
        _
      $region52: #{basic_block_forward.7} parent=27 // pred_fallthru
        _
    $region28: #{basic_block_forward.7} parent=5 // pred_fallthru
      _
    %p382 = scmp.le.s32.totalorder 2, %s11
    // Predicated region
    $region53: #{basic_block_forward.7} parent=5 // pred_check
      %p383 = pneg %p382
    $region54: #{basic_block_forward.7} parent=5 // pred_check_branch
      %385 = sbr.rel (%p383) target = $region56
    $region55: #{basic_block_forward.7} parent=5 // pred_region
      %s386 = ssub.s32 %s11, 2
      // Predicated region
      $region57: #{basic_block_forward.7} parent=55 // pred_check
        %p387 = pneg %p87
      $region58: #{basic_block_forward.7} parent=55 // pred_check_branch
        %389 = sbr.rel (%p387) target = $region60
      $region59: #{basic_block_forward.7} parent=55 // pred_region
        %s390 = smul.u32 8, %s17
        %p391 = scmp.lt.s32.totalorder %s390, 15
        %s392 = scalar_select %p391, %s390, 15
        %s393 = smul.addr %s392, 8
        %s394 = scalar_lea.vmem %s2, %s393
      $region60: #{basic_block_forward.7} parent=55 // pred_fallthru
        _
    $region56: #{basic_block_forward.7} parent=5 // pred_fallthru
      _
  $region6: #{basic_block_forward.7} parent=0 // loop_footer
    %s15 = sadd.s32 1, %s11
  $region7: #{basic_block_forward.7} parent=0 // loop_footer_branch
    %10 = sbr.rel target = $region3
  $region8: #{basic_block_forward.7} parent=0 // loop_exit
    _

// kernel: basic_block_forward.9
$region0: #{basic_block_forward.9}
  #allocation0 [shape = 'u32[]', space=smem, size = 0x4, offset = 0x4, fixed_abs, tag = 'smem constant byte address 0x4 - core index']
  #allocation1 [shape = 'u32[72,128]{1,0:T(1,128)}', space=vmem, size = 0x9000, scoped, tag = 'internal scratch']
  %s0 = inlined_call_operand.vmem [shape: f32[128,128], index: 0, kind: input, shape index: {}]
  %s1 = inlined_call_operand.vmem [shape: f32[128,128], index: 1, kind: input, shape index: {}]
  %s2 = inlined_call_operand.vmem [shape: f32[1,128], index: 2, kind: input, shape index: {}]
  %s3 = inlined_call_operand.vmem [shape: f32[1,128], index: 3, kind: input, shape index: {}]
  %s4 = inlined_call_operand.vmem [shape: f32[1,128], index: 4, kind: input, shape index: {}]
  %s5 = inlined_call_operand.vmem [shape: f32[1,128], index: 5, kind: input, shape index: {}]
  %s6 = inlined_call_operand.vmem [shape: f32[128,128], index: 6, kind: output, shape index: {}]
  %s7 = sld [smem:[#allocation0]]
  $region57: #{basic_block_forward.9} parent=0
    _
  %s9 = ssub.s32 1, %s7
  %s10 = scalar_select 0, %s9, %s7
  loop: start=0, step=1, limit=4
  $region2: #{basic_block_forward.9} parent=0 // loop_pre_header
    _
  $region3: #{basic_block_forward.9} parent=0 // loop_header
    %s12 = sphi 0, %s16
    %p13 = scmp.ge.s32.totalorder %s12, 4
    %s22 = sphi 0, %s24
    %s25 = sphi 0, %s22
    %s26 = sphi 0, %s25
    %s42 = sphi 0, %s26
    %s48 = sphi 0, %s50
    %s51 = sphi 0, %s48
    %s52 = sphi 0, %s51
    %s68 = sphi 0, %s52
    %s72 = sphi 0, %s72
    %s74 = sphi 0, %s72
    %s75 = sphi 0, %s74
    %s89 = sphi 0, %s75
    %s93 = sphi 0, %s93
    %s95 = sphi 0, %s93
    %s96 = sphi 0, %s95
    %s110 = sphi 0, %s96
    %s114 = sphi 0, %s114
    %s116 = sphi 0, %s114
    %s117 = sphi 0, %s116
    %s131 = sphi 0, %s117
    %s135 = sphi 0, %s135
    %s137 = sphi 0, %s135
    %s138 = sphi 0, %s137
    %s152 = sphi 0, %s138
    %s158 = sphi 0, %s160
    %s161 = sphi 0, %s158
    %s162 = sphi 0, %s161
    %s178 = sphi 0, %s162
  $region4: #{basic_block_forward.9} parent=0 // loop_header_branch
    %15 = sbr.rel (%p13) target = $region8
  $region5: #{basic_block_forward.9} parent=0 // loop_body
    %s17 = ssub.s32 %s12, 1
    %s18 = ssub.s32 %s12, 2
    %s19 = sadd.s32 %s12, 1
    %s20 = ssub.s32 %s12, %s19
    %p21 = scmp.eq.s32.totalorder %s20, 0
    %s23 = sadd.s32 %s22, 1
    %s24 = scalar_select %p21, %s22, %s23
    %p27 = pneg %p21
    %p28 = scmp.eq.s32.totalorder %s12, 1
    %p29 = por %p27, %p28
    %p30 = scmp.ne.s32.totalorder %s22, %s25
    %p31 = scmp.eq.s32.totalorder %s12, 0
    %p32 = por %p30, %p31
    %p33 = scmp.ne.s32.totalorder %s22, %s25
    %p34 = scmp.eq.s32.totalorder %s17, 1
    %p35 = por %p33, %p34
    %p36 = scmp.ne.s32.totalorder %s25, %s26
    %p37 = scmp.eq.s32.totalorder %s17, 0
    %p38 = por %p36, %p37
    %p39 = scmp.ne.s32.totalorder %s25, %s26
    %p40 = scmp.eq.s32.totalorder %s18, 1
    %p41 = por %p39, %p40
    %p43 = scmp.ne.s32.totalorder %s26, %s42
    %p44 = scmp.eq.s32.totalorder %s18, 0
    %p45 = por %p43, %p44
    %s46 = ssub.s32 %s12, %s19
    %p47 = scmp.eq.s32.totalorder %s46, 0
    %s49 = sadd.s32 %s48, 1
    %s50 = scalar_select %p47, %s48, %s49
    %p53 = pneg %p47
    %p54 = scmp.eq.s32.totalorder %s12, 1
    %p55 = por %p53, %p54
    %p56 = scmp.ne.s32.totalorder %s48, %s51
    %p57 = scmp.eq.s32.totalorder %s12, 0
    %p58 = por %p56, %p57
    %p59 = scmp.ne.s32.totalorder %s48, %s51
    %p60 = scmp.eq.s32.totalorder %s17, 1
    %p61 = por %p59, %p60
    %p62 = scmp.ne.s32.totalorder %s51, %s52
    %p63 = scmp.eq.s32.totalorder %s17, 0
    %p64 = por %p62, %p63
    %p65 = scmp.ne.s32.totalorder %s51, %s52
    %p66 = scmp.eq.s32.totalorder %s18, 1
    %p67 = por %p65, %p66
    %p69 = scmp.ne.s32.totalorder %s52, %s68
    %p70 = scmp.eq.s32.totalorder %s18, 0
    %p71 = por %p69, %p70
    %s73 = sadd.s32 %s72, 1
    %p76 = scmp.eq.s32.totalorder %s12, 1
    %p77 = scmp.ne.s32.totalorder %s72, %s74
    %p78 = scmp.eq.s32.totalorder %s12, 0
    %p79 = por %p77, %p78
    %p80 = scmp.ne.s32.totalorder %s72, %s74
    %p81 = scmp.eq.s32.totalorder %s17, 1
    %p82 = por %p80, %p81
    %p83 = scmp.ne.s32.totalorder %s74, %s75
    %p84 = scmp.eq.s32.totalorder %s17, 0
    %p85 = por %p83, %p84
    %p86 = scmp.ne.s32.totalorder %s74, %s75
    %p87 = scmp.eq.s32.totalorder %s18, 1
    %p88 = por %p86, %p87
    %p90 = scmp.ne.s32.totalorder %s75, %s89
    %p91 = scmp.eq.s32.totalorder %s18, 0
    %p92 = por %p90, %p91
    %s94 = sadd.s32 %s93, 1
    %p97 = scmp.eq.s32.totalorder %s12, 1
    %p98 = scmp.ne.s32.totalorder %s93, %s95
    %p99 = scmp.eq.s32.totalorder %s12, 0
    %p100 = por %p98, %p99
    %p101 = scmp.ne.s32.totalorder %s93, %s95
    %p102 = scmp.eq.s32.totalorder %s17, 1
    %p103 = por %p101, %p102
    %p104 = scmp.ne.s32.totalorder %s95, %s96
    %p105 = scmp.eq.s32.totalorder %s17, 0
    %p106 = por %p104, %p105
    %p107 = scmp.ne.s32.totalorder %s95, %s96
    %p108 = scmp.eq.s32.totalorder %s18, 1
    %p109 = por %p107, %p108
    %p111 = scmp.ne.s32.totalorder %s96, %s110
    %p112 = scmp.eq.s32.totalorder %s18, 0
    %p113 = por %p111, %p112
    %s115 = sadd.s32 %s114, 1
    %p118 = scmp.eq.s32.totalorder %s12, 1
    %p119 = scmp.ne.s32.totalorder %s114, %s116
    %p120 = scmp.eq.s32.totalorder %s12, 0
    %p121 = por %p119, %p120
    %p122 = scmp.ne.s32.totalorder %s114, %s116
    %p123 = scmp.eq.s32.totalorder %s17, 1
    %p124 = por %p122, %p123
    %p125 = scmp.ne.s32.totalorder %s116, %s117
    %p126 = scmp.eq.s32.totalorder %s17, 0
    %p127 = por %p125, %p126
    %p128 = scmp.ne.s32.totalorder %s116, %s117
    %p129 = scmp.eq.s32.totalorder %s18, 1
    %p130 = por %p128, %p129
    %p132 = scmp.ne.s32.totalorder %s117, %s131
    %p133 = scmp.eq.s32.totalorder %s18, 0
    %p134 = por %p132, %p133
    %s136 = sadd.s32 %s135, 1
    %p139 = scmp.eq.s32.totalorder %s12, 1
    %p140 = scmp.ne.s32.totalorder %s135, %s137
    %p141 = scmp.eq.s32.totalorder %s12, 0
    %p142 = por %p140, %p141
    %p143 = scmp.ne.s32.totalorder %s135, %s137
    %p144 = scmp.eq.s32.totalorder %s17, 1
    %p145 = por %p143, %p144
    %p146 = scmp.ne.s32.totalorder %s137, %s138
    %p147 = scmp.eq.s32.totalorder %s17, 0
    %p148 = por %p146, %p147
    %p149 = scmp.ne.s32.totalorder %s137, %s138
    %p150 = scmp.eq.s32.totalorder %s18, 1
    %p151 = por %p149, %p150
    %p153 = scmp.ne.s32.totalorder %s138, %s152
    %p154 = scmp.eq.s32.totalorder %s18, 0
    %p155 = por %p153, %p154
    %s156 = ssub.s32 %s12, %s19
    %p157 = scmp.eq.s32.totalorder %s156, 0
    %s159 = sadd.s32 %s158, 1
    %s160 = scalar_select %p157, %s158, %s159
    %p163 = pneg %p157
    %p164 = scmp.eq.s32.totalorder %s12, 1
    %p165 = por %p163, %p164
    %p166 = scmp.ne.s32.totalorder %s158, %s161
    %p167 = scmp.eq.s32.totalorder %s12, 0
    %p168 = por %p166, %p167
    %p169 = scmp.ne.s32.totalorder %s158, %s161
    %p170 = scmp.eq.s32.totalorder %s17, 1
    %p171 = por %p169, %p170
    %p172 = scmp.ne.s32.totalorder %s161, %s162
    %p173 = scmp.eq.s32.totalorder %s17, 0
    %p174 = por %p172, %p173
    %p175 = scmp.ne.s32.totalorder %s161, %s162
    %p176 = scmp.eq.s32.totalorder %s18, 1
    %p177 = por %p175, %p176
    %p179 = scmp.ne.s32.totalorder %s162, %s178
    %p180 = scmp.eq.s32.totalorder %s18, 0
    %p181 = por %p179, %p180
    %p182 = scmp.le.s32.totalorder 1, %s12
    %p183 = scmp.lt.s32.totalorder %s12, 3
    %p184 = pnand %p182, %p183
    %p185 = pneg %p184
    // Predicated region
    $region9: #{basic_block_forward.9} parent=5 // pred_check
      _
    $region10: #{basic_block_forward.9} parent=5 // pred_check_branch
      %187 = sbr.rel (%p184) target = $region12
    $region11: #{basic_block_forward.9} parent=5 // pred_region
      %s188 = ssub.s32 %s12, 1
      // Predicated region
      $region13: #{basic_block_forward.9} parent=11 // pred_check
        %p189 = pneg %p85
      $region14: #{basic_block_forward.9} parent=11 // pred_check_branch
        %191 = sbr.rel (%p189) target = $region16
      $region15: #{basic_block_forward.9} parent=11 // pred_region
        _
      $region16: #{basic_block_forward.9} parent=11 // pred_fallthru
        _
      // Predicated region
      $region17: #{basic_block_forward.9} parent=11 // pred_check
        %p192 = pneg %p106
      $region18: #{basic_block_forward.9} parent=11 // pred_check_branch
        %194 = sbr.rel (%p192) target = $region20
      $region19: #{basic_block_forward.9} parent=11 // pred_region
        _
      $region20: #{basic_block_forward.9} parent=11 // pred_fallthru
        _
      // Predicated region
      $region21: #{basic_block_forward.9} parent=11 // pred_check
        %p195 = pneg %p127
      $region22: #{basic_block_forward.9} parent=11 // pred_check_branch
        %197 = sbr.rel (%p195) target = $region24
      $region23: #{basic_block_forward.9} parent=11 // pred_region
        _
      $region24: #{basic_block_forward.9} parent=11 // pred_fallthru
        _
      // Predicated region
      $region25: #{basic_block_forward.9} parent=11 // pred_check
        %p198 = pneg %p148
      $region26: #{basic_block_forward.9} parent=11 // pred_check_branch
        %200 = sbr.rel (%p198) target = $region28
      $region27: #{basic_block_forward.9} parent=11 // pred_region
        _
      $region28: #{basic_block_forward.9} parent=11 // pred_fallthru
        _
    $region12: #{basic_block_forward.9} parent=5 // pred_fallthru
      _
    %p201 = scmp.lt.s32.totalorder %s12, 2
    // Predicated region
    $region29: #{basic_block_forward.9} parent=5 // pred_check
      %p202 = pneg %p201
    $region30: #{basic_block_forward.9} parent=5 // pred_check_branch
      %204 = sbr.rel (%p202) target = $region32
    $region31: #{basic_block_forward.9} parent=5 // pred_region
      // Predicated region
      $region33: #{basic_block_forward.9} parent=31 // pred_check
        %p205 = pneg %p32
      $region34: #{basic_block_forward.9} parent=31 // pred_check_branch
        %207 = sbr.rel (%p205) target = $region36
      $region35: #{basic_block_forward.9} parent=31 // pred_region
        %s208 = smul.u32 8, %s12
        %p209 = scmp.lt.s32.totalorder %s208, 15
        %s210 = scalar_select %p209, %s208, 15
        %s211 = smul.addr %s210, 8
        %s212 = scalar_lea.vmem %s0, %s211
        %s213 = smul.u32 8, %s12
      $region36: #{basic_block_forward.9} parent=31 // pred_fallthru
        _
      // Predicated region
      $region37: #{basic_block_forward.9} parent=31 // pred_check
        %p214 = pneg %p58
      $region38: #{basic_block_forward.9} parent=31 // pred_check_branch
        %216 = sbr.rel (%p214) target = $region40
      $region39: #{basic_block_forward.9} parent=31 // pred_region
        %s217 = smul.u32 8, %s12
        %p218 = scmp.lt.s32.totalorder %s217, 15
        %s219 = scalar_select %p218, %s217, 15
        %s220 = smul.addr %s219, 8
        %s221 = scalar_lea.vmem %s1, %s220
        %s222 = smul.u32 8, %s12
      $region40: #{basic_block_forward.9} parent=31 // pred_fallthru
        _
    $region32: #{basic_block_forward.9} parent=5 // pred_fallthru
      _
    %p223 = scmp.le.s32.totalorder 1, %s12
    %p224 = scmp.lt.s32.totalorder %s12, 3
    %p225 = pnand %p223, %p224
    %p226 = pneg %p225
    // Predicated region
    $region41: #{basic_block_forward.9} parent=5 // pred_check
      _
    $region42: #{basic_block_forward.9} parent=5 // pred_check_branch
      %228 = sbr.rel (%p225) target = $region44
    $region43: #{basic_block_forward.9} parent=5 // pred_region
      %s229 = ssub.s32 %s12, 1
      %s230 = smul.u32 8, %s17
      %p231 = scmp.lt.s32.totalorder %s230, 15
      %s232 = scalar_select %p231, %s230, 15
      %s233 = smul.addr %s232, 8
      %s234 = scalar_lea.vmem %s0, %s233
      %p235 = pneg %p38
      %p236 = pneg %p35
      %s237 = smul.u32 8, %s17
      %p238 = scmp.lt.s32.totalorder %s237, 15
      %s239 = scalar_select %p238, %s237, 15
      %s240 = smul.addr %s239, 8
      %s241 = scalar_lea.vmem %s1, %s240
      %p242 = pneg %p64
      %p243 = pneg %p61
      %p244 = pneg %p85
      %p245 = pneg %p82
      %p246 = pneg %p106
      %p247 = pneg %p103
      %p248 = pneg %p127
      %p249 = pneg %p124
      %p250 = pneg %p148
      %p251 = pneg %p145
      %p252 = pneg %p174
      %p253 = pneg %p171
      %s254 = smul.u32 8, %s17
      %p255 = scmp.lt.s32.totalorder %s254, 15
      %s256 = scalar_select %p255, %s254, 15
      %s257 = smul.addr %s256, 8
      %s258 = scalar_lea.vmem %s6, %s257
      %s259 = smul.u32 8, %s17
      %p260 = scmp.lt.s32.totalorder %s259, 15
      %s261 = scalar_select %p260, %s259, 15
      %s262 = smul.addr %s261, 8
      %s263 = scalar_lea.vmem %s0, %s262
      %s264 = smul.u32 8, %s17
      %s265 = smul.u32 8, %s17
      %p266 = scmp.lt.s32.totalorder %s265, 15
      %s267 = scalar_select %p266, %s265, 15
      %s268 = smul.addr %s267, 8
      %s269 = scalar_lea.vmem %s1, %s268
      %s270 = smul.u32 8, %s17
      %s271 = smul.u32 8, %s17
      %p272 = scmp.lt.s32.totalorder %s271, 15
      %s273 = scalar_select %p272, %s271, 15
      %s274 = smul.addr %s273, 8
      %s275 = scalar_lea.vmem %s6, %s274
      %s276 = smul.u32 8, %s17
      %v277 = vld [vmem:[%s263] sm:$0xff]
      %v278 = vld [vmem:[%s263 + $0x8] sm:$0xff]
      %v279 = vld [vmem:[%s263 + $0x10] sm:$0xff]
      %v280 = vld [vmem:[%s263 + $0x18] sm:$0xff]
      %v281 = vld [vmem:[%s263 + $0x20] sm:$0xff]
      %v282 = vld [vmem:[%s263 + $0x28] sm:$0xff]
      %v283 = vld [vmem:[%s263 + $0x30] sm:$0xff]
      %v284 = vld [vmem:[%s263 + $0x38] sm:$0xff]
      %v285 = vld [vmem:[%s2] sm:$0x1]
      %v287 = vperm.slane %v285, 0
      %v289 = vmul.f32 %v277, %v287
      %v290 = vmul.f32 %v278, %v287
      %v291 = vmul.f32 %v279, %v287
      %v292 = vmul.f32 %v280, %v287
      %v293 = vmul.f32 %v281, %v287
      %v294 = vmul.f32 %v282, %v287
      %v295 = vmul.f32 %v283, %v287
      %v296 = vmul.f32 %v284, %v287
      %v297 = vld [vmem:[%s3] sm:$0x1]
      %v299 = vperm.slane %v297, 0
      %v301 = vadd.f32 %v289, %v299
      %v302 = vadd.f32 %v290, %v299
      %v303 = vadd.f32 %v291, %v299
      %v304 = vadd.f32 %v292, %v299
      %v305 = vadd.f32 %v293, %v299
      %v306 = vadd.f32 %v294, %v299
      %v307 = vadd.f32 %v295, %v299
      %v308 = vadd.f32 %v296, %v299
      %v309 = vld [vmem:[%s269] sm:$0xff]
      %v310 = vld [vmem:[%s269 + $0x8] sm:$0xff]
      %v311 = vld [vmem:[%s269 + $0x10] sm:$0xff]
      %v312 = vld [vmem:[%s269 + $0x18] sm:$0xff]
      %v313 = vld [vmem:[%s269 + $0x20] sm:$0xff]
      %v314 = vld [vmem:[%s269 + $0x28] sm:$0xff]
      %v315 = vld [vmem:[%s269 + $0x30] sm:$0xff]
      %v316 = vld [vmem:[%s269 + $0x38] sm:$0xff]
      %v317 = vld [vmem:[%s4] sm:$0x1]
      %v319 = vperm.slane %v317, 0
      %v321 = vmul.f32 %v309, %v319
      %v322 = vmul.f32 %v310, %v319
      %v323 = vmul.f32 %v311, %v319
      %v324 = vmul.f32 %v312, %v319
      %v325 = vmul.f32 %v313, %v319
      %v326 = vmul.f32 %v314, %v319
      %v327 = vmul.f32 %v315, %v319
      %v328 = vmul.f32 %v316, %v319
      %v329 = vadd.f32 %v301, %v321
      %v330 = vadd.f32 %v302, %v322
      %v331 = vadd.f32 %v303, %v323
      %v332 = vadd.f32 %v304, %v324
      %v333 = vadd.f32 %v305, %v325
      %v334 = vadd.f32 %v306, %v326
      %v335 = vadd.f32 %v307, %v327
      %v336 = vadd.f32 %v308, %v328
      %v337 = vld [vmem:[%s5] sm:$0x1]
      %v339 = vperm.slane %v337, 0
      %v341 = vadd.f32 %v329, %v339
      %v342 = vadd.f32 %v330, %v339
      %v343 = vadd.f32 %v331, %v339
      %v344 = vadd.f32 %v332, %v339
      %v345 = vadd.f32 %v333, %v339
      %v346 = vadd.f32 %v334, %v339
      %v347 = vadd.f32 %v335, %v339
      %v348 = vadd.f32 %v336, %v339
      %v349 = vmax.f32 %v341, 0.0
      %v350 = vmax.f32 %v342, 0.0
      %v351 = vmax.f32 %v343, 0.0
      %v352 = vmax.f32 %v344, 0.0
      %v353 = vmax.f32 %v345, 0.0
      %v354 = vmax.f32 %v346, 0.0
      %v355 = vmax.f32 %v347, 0.0
      %v356 = vmax.f32 %v348, 0.0
      %357 = vst [vmem:[%s275] sm:$0xff] %v349
      %358 = vst [vmem:[%s275 + $0x8] sm:$0xff] %v350
      %359 = vst [vmem:[%s275 + $0x10] sm:$0xff] %v351
      %360 = vst [vmem:[%s275 + $0x18] sm:$0xff] %v352
      %361 = vst [vmem:[%s275 + $0x20] sm:$0xff] %v353
      %362 = vst [vmem:[%s275 + $0x28] sm:$0xff] %v354
      %363 = vst [vmem:[%s275 + $0x30] sm:$0xff] %v355
      %364 = vst [vmem:[%s275 + $0x38] sm:$0xff] %v356
      %s365 = smul.u32 8, %s17
      %p366 = scmp.lt.s32.totalorder %s365, 15
      %s367 = scalar_select %p366, %s365, 15
      %s368 = smul.addr %s367, 8
      %s369 = scalar_lea.vmem %s6, %s368
      // Predicated region
      $region45: #{basic_block_forward.9} parent=43 // pred_check
        %p370 = pneg %p171
      $region46: #{basic_block_forward.9} parent=43 // pred_check_branch
        %372 = sbr.rel (%p370) target = $region48
      $region47: #{basic_block_forward.9} parent=43 // pred_region
        %s373 = smul.u32 8, %s17
      $region48: #{basic_block_forward.9} parent=43 // pred_fallthru
        _
    $region44: #{basic_block_forward.9} parent=5 // pred_fallthru
      _
    %p374 = scmp.le.s32.totalorder 2, %s12
    // Predicated region
    $region49: #{basic_block_forward.9} parent=5 // pred_check
      %p375 = pneg %p374
    $region50: #{basic_block_forward.9} parent=5 // pred_check_branch
      %377 = sbr.rel (%p375) target = $region52
    $region51: #{basic_block_forward.9} parent=5 // pred_region
      %s378 = ssub.s32 %s12, 2
      // Predicated region
      $region53: #{basic_block_forward.9} parent=51 // pred_check
        %p379 = pneg %p177
      $region54: #{basic_block_forward.9} parent=51 // pred_check_branch
        %381 = sbr.rel (%p379) target = $region56
      $region55: #{basic_block_forward.9} parent=51 // pred_region
        %s382 = smul.u32 8, %s18
        %p383 = scmp.lt.s32.totalorder %s382, 15
        %s384 = scalar_select %p383, %s382, 15
        %s385 = smul.addr %s384, 8
        %s386 = scalar_lea.vmem %s6, %s385
      $region56: #{basic_block_forward.9} parent=51 // pred_fallthru
        _
    $region52: #{basic_block_forward.9} parent=5 // pred_fallthru
      _
  $region6: #{basic_block_forward.9} parent=0 // loop_footer
    %s16 = sadd.s32 1, %s12
  $region7: #{basic_block_forward.9} parent=0 // loop_footer_branch
    %11 = sbr.rel target = $region3
  $region8: #{basic_block_forward.9} parent=0 // loop_exit
    _

// kernel: basic_block_forward.8
$region0: #{basic_block_forward.8}
  #allocation0 [shape = 'u32[]', space=smem, size = 0x4, offset = 0x4, fixed_abs, tag = 'smem constant byte address 0x4 - core index']
  #allocation1 [shape = 'u32[72,128]{1,0:T(1,128)}', space=vmem, size = 0x9000, scoped, tag = 'internal scratch']
  %s0 = inlined_call_operand.vmem [shape: bf16[128,4], index: 0, kind: input, shape index: {}]
  %s1 = inlined_call_operand.vmem [shape: bf16[4,128], index: 1, kind: input, shape index: {}]
  %s2 = inlined_call_operand.vmem [shape: f32[128,128], index: 2, kind: output, shape index: {0}]
  %s3 = inlined_call_operand.vmem [shape: f32[1,128], index: 3, kind: output, shape index: {1}]
  %s4 = inlined_call_operand.vmem [shape: f32[1,128], index: 4, kind: output, shape index: {2}]
  %5 = xla_tuple %s2, %s3, %s4
  %s6 = sld [smem:[#allocation0]]
  $region61: #{basic_block_forward.8} parent=0
    _
  %s8 = ssub.s32 1, %s6
  %s9 = scalar_select 0, %s8, %s6
  loop: start=0, step=1, limit=4
  $region2: #{basic_block_forward.8} parent=0 // loop_pre_header
    _
  $region3: #{basic_block_forward.8} parent=0 // loop_header
    %s11 = sphi 0, %s15
    %p12 = scmp.ge.s32.totalorder %s11, 4
    %s21 = sphi 0, %s23
    %s24 = sphi 0, %s21
    %s25 = sphi 0, %s24
    %s41 = sphi 0, %s25
    %s45 = sphi 0, %s45
    %s47 = sphi 0, %s45
    %s48 = sphi 0, %s47
    %s62 = sphi 0, %s48
    %s68 = sphi 0, %s70
    %s71 = sphi 0, %s68
    %s72 = sphi 0, %s71
    %s88 = sphi 0, %s72
    %s92 = sphi 0, %s92
    %s94 = sphi 0, %s92
    %s95 = sphi 0, %s94
    %s109 = sphi 0, %s95
    %s113 = sphi 0, %s113
    %s115 = sphi 0, %s113
    %s116 = sphi 0, %s115
    %s130 = sphi 0, %s116
  $region4: #{basic_block_forward.8} parent=0 // loop_header_branch
    %14 = sbr.rel (%p12) target = $region8
  $region5: #{basic_block_forward.8} parent=0 // loop_body
    %s16 = ssub.s32 %s11, 1
    %s17 = ssub.s32 %s11, 2
    %s18 = sadd.s32 %s11, 1
    %s19 = ssub.s32 %s11, %s18
    %p20 = scmp.eq.s32.totalorder %s19, 0
    %s22 = sadd.s32 %s21, 1
    %s23 = scalar_select %p20, %s21, %s22
    %p26 = pneg %p20
    %p27 = scmp.eq.s32.totalorder %s11, 1
    %p28 = por %p26, %p27
    %p29 = scmp.ne.s32.totalorder %s21, %s24
    %p30 = scmp.eq.s32.totalorder %s11, 0
    %p31 = por %p29, %p30
    %p32 = scmp.ne.s32.totalorder %s21, %s24
    %p33 = scmp.eq.s32.totalorder %s16, 1
    %p34 = por %p32, %p33
    %p35 = scmp.ne.s32.totalorder %s24, %s25
    %p36 = scmp.eq.s32.totalorder %s16, 0
    %p37 = por %p35, %p36
    %p38 = scmp.ne.s32.totalorder %s24, %s25
    %p39 = scmp.eq.s32.totalorder %s17, 1
    %p40 = por %p38, %p39
    %p42 = scmp.ne.s32.totalorder %s25, %s41
    %p43 = scmp.eq.s32.totalorder %s17, 0
    %p44 = por %p42, %p43
    %s46 = sadd.s32 %s45, 1
    %p49 = scmp.eq.s32.totalorder %s11, 1
    %p50 = scmp.ne.s32.totalorder %s45, %s47
    %p51 = scmp.eq.s32.totalorder %s11, 0
    %p52 = por %p50, %p51
    %p53 = scmp.ne.s32.totalorder %s45, %s47
    %p54 = scmp.eq.s32.totalorder %s16, 1
    %p55 = por %p53, %p54
    %p56 = scmp.ne.s32.totalorder %s47, %s48
    %p57 = scmp.eq.s32.totalorder %s16, 0
    %p58 = por %p56, %p57
    %p59 = scmp.ne.s32.totalorder %s47, %s48
    %p60 = scmp.eq.s32.totalorder %s17, 1
    %p61 = por %p59, %p60
    %p63 = scmp.ne.s32.totalorder %s48, %s62
    %p64 = scmp.eq.s32.totalorder %s17, 0
    %p65 = por %p63, %p64
    %s66 = ssub.s32 %s11, %s18
    %p67 = scmp.eq.s32.totalorder %s66, 0
    %s69 = sadd.s32 %s68, 1
    %s70 = scalar_select %p67, %s68, %s69
    %p73 = pneg %p67
    %p74 = scmp.eq.s32.totalorder %s11, 1
    %p75 = por %p73, %p74
    %p76 = scmp.ne.s32.totalorder %s68, %s71
    %p77 = scmp.eq.s32.totalorder %s11, 0
    %p78 = por %p76, %p77
    %p79 = scmp.ne.s32.totalorder %s68, %s71
    %p80 = scmp.eq.s32.totalorder %s16, 1
    %p81 = por %p79, %p80
    %p82 = scmp.ne.s32.totalorder %s71, %s72
    %p83 = scmp.eq.s32.totalorder %s16, 0
    %p84 = por %p82, %p83
    %p85 = scmp.ne.s32.totalorder %s71, %s72
    %p86 = scmp.eq.s32.totalorder %s17, 1
    %p87 = por %p85, %p86
    %p89 = scmp.ne.s32.totalorder %s72, %s88
    %p90 = scmp.eq.s32.totalorder %s17, 0
    %p91 = por %p89, %p90
    %s93 = sadd.s32 %s92, 1
    %p96 = scmp.eq.s32.totalorder %s11, 1
    %p97 = scmp.ne.s32.totalorder %s92, %s94
    %p98 = scmp.eq.s32.totalorder %s11, 0
    %p99 = por %p97, %p98
    %p100 = scmp.ne.s32.totalorder %s92, %s94
    %p101 = scmp.eq.s32.totalorder %s16, 1
    %p102 = por %p100, %p101
    %p103 = scmp.ne.s32.totalorder %s94, %s95
    %p104 = scmp.eq.s32.totalorder %s16, 0
    %p105 = por %p103, %p104
    %p106 = scmp.ne.s32.totalorder %s94, %s95
    %p107 = scmp.eq.s32.totalorder %s17, 1
    %p108 = por %p106, %p107
    %p110 = scmp.ne.s32.totalorder %s95, %s109
    %p111 = scmp.eq.s32.totalorder %s17, 0
    %p112 = por %p110, %p111
    %s114 = sadd.s32 %s113, 1
    %p117 = scmp.eq.s32.totalorder %s11, 1
    %p118 = scmp.ne.s32.totalorder %s113, %s115
    %p119 = scmp.eq.s32.totalorder %s11, 0
    %p120 = por %p118, %p119
    %p121 = scmp.ne.s32.totalorder %s113, %s115
    %p122 = scmp.eq.s32.totalorder %s16, 1
    %p123 = por %p121, %p122
    %p124 = scmp.ne.s32.totalorder %s115, %s116
    %p125 = scmp.eq.s32.totalorder %s16, 0
    %p126 = por %p124, %p125
    %p127 = scmp.ne.s32.totalorder %s115, %s116
    %p128 = scmp.eq.s32.totalorder %s17, 1
    %p129 = por %p127, %p128
    %p131 = scmp.ne.s32.totalorder %s116, %s130
    %p132 = scmp.eq.s32.totalorder %s17, 0
    %p133 = por %p131, %p132
    %p134 = scmp.le.s32.totalorder 1, %s11
    %p135 = scmp.lt.s32.totalorder %s11, 3
    %p136 = pnand %p134, %p135
    %p137 = pneg %p136
    // Predicated region
    $region9: #{basic_block_forward.8} parent=5 // pred_check
      _
    $region10: #{basic_block_forward.8} parent=5 // pred_check_branch
      %139 = sbr.rel (%p136) target = $region12
    $region11: #{basic_block_forward.8} parent=5 // pred_region
      %s140 = ssub.s32 %s11, 1
      // Predicated region
      $region13: #{basic_block_forward.8} parent=11 // pred_check
        %p141 = pneg %p58
      $region14: #{basic_block_forward.8} parent=11 // pred_check_branch
        %143 = sbr.rel (%p141) target = $region16
      $region15: #{basic_block_forward.8} parent=11 // pred_region
        _
      $region16: #{basic_block_forward.8} parent=11 // pred_fallthru
        _
    $region12: #{basic_block_forward.8} parent=5 // pred_fallthru
      _
    %p144 = scmp.lt.s32.totalorder %s11, 2
    // Predicated region
    $region17: #{basic_block_forward.8} parent=5 // pred_check
      %p145 = pneg %p144
    $region18: #{basic_block_forward.8} parent=5 // pred_check_branch
      %147 = sbr.rel (%p145) target = $region20
    $region19: #{basic_block_forward.8} parent=5 // pred_region
      // Predicated region
      $region21: #{basic_block_forward.8} parent=19 // pred_check
        %p148 = pneg %p31
      $region22: #{basic_block_forward.8} parent=19 // pred_check_branch
        %150 = sbr.rel (%p148) target = $region24
      $region23: #{basic_block_forward.8} parent=19 // pred_region
        %s151 = smul.u32 8, %s11
        %p152 = scmp.lt.s32.totalorder %s151, 15
        %s153 = scalar_select %p152, %s151, 15
        %s154 = smul.addr %s153, 4
        %s155 = scalar_lea.vmem %s0, %s154
        %s156 = smul.u32 8, %s11
      $region24: #{basic_block_forward.8} parent=19 // pred_fallthru
        _
    $region20: #{basic_block_forward.8} parent=5 // pred_fallthru
      _
    %p157 = scmp.le.s32.totalorder 1, %s11
    %p158 = scmp.lt.s32.totalorder %s11, 3
    %p159 = pnand %p157, %p158
    %p160 = pneg %p159
    // Predicated region
    $region25: #{basic_block_forward.8} parent=5 // pred_check
      _
    $region26: #{basic_block_forward.8} parent=5 // pred_check_branch
      %162 = sbr.rel (%p159) target = $region28
    $region27: #{basic_block_forward.8} parent=5 // pred_region
      %s163 = ssub.s32 %s11, 1
      %s164 = smul.u32 8, %s16
      %p165 = scmp.lt.s32.totalorder %s164, 15
      %s166 = scalar_select %p165, %s164, 15
      %s167 = smul.addr %s166, 4
      %s168 = scalar_lea.vmem %s0, %s167
      %p169 = pneg %p37
      %p170 = pneg %p34
      %p171 = pneg %p58
      %p172 = pneg %p55
      %p173 = pneg %p84
      %p174 = pneg %p81
      %s175 = smul.u32 8, %s16
      %p176 = scmp.lt.s32.totalorder %s175, 15
      %s177 = scalar_select %p176, %s175, 15
      %s178 = smul.addr %s177, 8
      %s179 = scalar_lea.vmem %s2, %s178
      %p180 = pneg %p105
      %p181 = pneg %p102
      %p182 = pneg %p126
      %p183 = pneg %p123
      %s184 = smul.u32 8, %s16
      %p185 = scmp.lt.s32.totalorder %s184, 15
      %s186 = scalar_select %p185, %s184, 15
      %s187 = smul.addr %s186, 4
      %s188 = scalar_lea.vmem %s0, %s187
      %s189 = smul.u32 8, %s16
      %s190 = smul.u32 8, %s16
      %p191 = scmp.lt.s32.totalorder %s190, 15
      %s192 = scalar_select %p191, %s190, 15
      %s193 = smul.addr %s192, 8
      %s194 = scalar_lea.vmem %s2, %s193
      %s195 = smul.u32 8, %s16
      %p197 = scmp.eq.s32.totalorder %s16, 0
      // Predicated region
      $region29: #{basic_block_forward.8} parent=27 // pred_check
        %p198 = pneg %p197
      $region30: #{basic_block_forward.8} parent=27 // pred_check_branch
        %200 = sbr.rel (%p198) target = $region32
      $region31: #{basic_block_forward.8} parent=27 // pred_region
        %201 = vst [vmem:[%s3] sm:$0x1] 0.0
        %202 = vst [vmem:[%s4] sm:$0x1] 0.0
      $region32: #{basic_block_forward.8} parent=27 // pred_fallthru
        _
      %v203 = vld [vmem:[%s188] sm:$0xf]
      %v204 = vld [vmem:[%s188 + $0x4] sm:$0xf]
      %v205 = vld [vmem:[%s188 + $0x8] sm:$0xf]
      %v206 = vld [vmem:[%s188 + $0xc] sm:$0xf]
      %v207 = vld [vmem:[%s188 + $0x10] sm:$0xf]
      %v208 = vld [vmem:[%s188 + $0x14] sm:$0xf]
      %v209 = vld [vmem:[%s188 + $0x18] sm:$0xf]
      %v210 = vld [vmem:[%s188 + $0x1c] sm:$0xf]
      %v211 = vld [vmem:[%s1] sm:$0x3]
      %v220 = vunpack.c.l.b16 %v203
      %v221 = vunpack.c.l.b16 %v204
      %v222 = vunpack.c.l.b16 %v205
      %v223 = vunpack.c.l.b16 %v206
      %v224 = vunpack.c.l.b16 %v207
      %v225 = vunpack.c.l.b16 %v208
      %v226 = vunpack.c.l.b16 %v209
      %v227 = vunpack.c.l.b16 %v210
      %v228 = vpack.c.b16 %v221, %v220
      %v229 = vpack.c.b16 %v223, %v222
      %v230 = vpack.c.b16 %v225, %v224
      %v231 = vpack.c.b16 %v227, %v226
      %vm232 = vcmask 31744
      %v234 = vsel %vm232, %v228, 0
      %v237 = vsel %vm232, %v229, 0
      %v240 = vsel %vm232, %v230, 0
      %v243 = vsel %vm232, %v231, 0
      %vm245 = vcmask 1041408
      %v247 = vsel %vm245, %v211, 0
      %249 = vmatpush.bf16.msra.mxu0 0
      %250 = vmatpush.bf16.msra.mxu0 0
      %251 = vmatpush.bf16.msra.mxu0 0
      %252 = vmatpush.bf16.msra.mxu0 0
      %253 = vmatpush.bf16.msra.mxu0 0
      %254 = vmatpush.bf16.msra.mxu0 0
      %255 = vmatpush.bf16.msra.mxu0 0
      %256 = vmatpush.bf16.msra.mxu0 %v247
      %257 = vmatmul.bf16.gmra.mxu0 %v234
      %v258 = vpop.f32.mrf.mxu0
      %v259 = vadd.f32 0.0, %v258
      %v260 = vpop.f32.mrf.mxu0
      %v261 = vadd.f32 0.0, %v260
      %262 = vmatmul.bf16.gmra.mxu0 %v237
      %v263 = vpop.f32.mrf.mxu0
      %v264 = vadd.f32 0.0, %v263
      %v265 = vpop.f32.mrf.mxu0
      %v266 = vadd.f32 0.0, %v265
      %267 = vmatmul.bf16.gmra.mxu0 %v240
      %v268 = vpop.f32.mrf.mxu0
      %v269 = vadd.f32 0.0, %v268
      %v270 = vpop.f32.mrf.mxu0
      %v271 = vadd.f32 0.0, %v270
      %272 = vmatmul.bf16.gmra.mxu0 %v243
      %v273 = vpop.f32.mrf.mxu0
      %v274 = vadd.f32 0.0, %v273
      %v275 = vpop.f32.mrf.mxu0
      %v276 = vadd.f32 0.0, %v275
      %277 = vdwg.mxu0
      %278 = vst [vmem:[%s194] sm:$0xff] %v259
      %279 = vst [vmem:[%s194 + $0x8] sm:$0xff] %v261
      %280 = vst [vmem:[%s194 + $0x10] sm:$0xff] %v264
      %281 = vst [vmem:[%s194 + $0x18] sm:$0xff] %v266
      %282 = vst [vmem:[%s194 + $0x20] sm:$0xff] %v269
      %283 = vst [vmem:[%s194 + $0x28] sm:$0xff] %v271
      %284 = vst [vmem:[%s194 + $0x30] sm:$0xff] %v274
      %285 = vst [vmem:[%s194 + $0x38] sm:$0xff] %v276
      %v286 = vld [vmem:[%s3] sm:$0x1]
      %v287 = vadd.f32 %v259, %v261
      %v288 = vadd.f32 %v287, %v264
      %v289 = vadd.f32 %v288, %v266
      %v290 = vadd.f32 %v289, %v269
      %v291 = vadd.f32 %v290, %v271
      %v292 = vadd.f32 %v291, %v274
      %v293 = vadd.f32 %v292, %v276
      %v294 = vrot.slane %v293, 4
      %v295 = vadd.f32 %v293, %v294
      %v296 = vrot.slane %v295, 2
      %v297 = vadd.f32 %v295, %v296
      %v298 = vrot.slane %v297, 1
      %v299 = vadd.f32 %v297, %v298
      %v300 = vadd.f32 %v286, %v299
      %301 = vst [vmem:[%s3] sm:$0x1] %v300
      %v302 = vld [vmem:[%s4] sm:$0x1]
      %v303 = vmul.f32 %v259, %v259
      %v304 = vmul.f32 %v261, %v261
      %v305 = vmul.f32 %v264, %v264
      %v306 = vmul.f32 %v266, %v266
      %v307 = vmul.f32 %v269, %v269
      %v308 = vmul.f32 %v271, %v271
      %v309 = vmul.f32 %v274, %v274
      %v310 = vmul.f32 %v276, %v276
      %v311 = vadd.f32 %v303, %v304
      %v312 = vadd.f32 %v311, %v305
      %v313 = vadd.f32 %v312, %v306
      %v314 = vadd.f32 %v313, %v307
      %v315 = vadd.f32 %v314, %v308
      %v316 = vadd.f32 %v315, %v309
      %v317 = vadd.f32 %v316, %v310
      %v318 = vrot.slane %v317, 4
      %v319 = vadd.f32 %v317, %v318
      %v320 = vrot.slane %v319, 2
      %v321 = vadd.f32 %v319, %v320
      %v322 = vrot.slane %v321, 1
      %v323 = vadd.f32 %v321, %v322
      %v324 = vadd.f32 %v302, %v323
      %325 = vst [vmem:[%s4] sm:$0x1] %v324
      %s326 = smul.u32 8, %s16
      %p327 = scmp.lt.s32.totalorder %s326, 15
      %s328 = scalar_select %p327, %s326, 15
      %s329 = smul.addr %s328, 8
      %s330 = scalar_lea.vmem %s2, %s329
      // Predicated region
      $region33: #{basic_block_forward.8} parent=27 // pred_check
        %p331 = pneg %p81
      $region34: #{basic_block_forward.8} parent=27 // pred_check_branch
        %333 = sbr.rel (%p331) target = $region36
      $region35: #{basic_block_forward.8} parent=27 // pred_region
        %s334 = smul.u32 8, %s16
      $region36: #{basic_block_forward.8} parent=27 // pred_fallthru
        _
      // Predicated region
      $region37: #{basic_block_forward.8} parent=27 // pred_check
        %p335 = pneg %p102
      $region38: #{basic_block_forward.8} parent=27 // pred_check_branch
        %337 = sbr.rel (%p335) target = $region40
      $region39: #{basic_block_forward.8} parent=27 // pred_region
        _
      $region40: #{basic_block_forward.8} parent=27 // pred_fallthru
        _
      // Predicated region
      $region41: #{basic_block_forward.8} parent=27 // pred_check
        %p338 = pneg %p123
      $region42: #{basic_block_forward.8} parent=27 // pred_check_branch
        %340 = sbr.rel (%p338) target = $region44
      $region43: #{basic_block_forward.8} parent=27 // pred_region
        _
      $region44: #{basic_block_forward.8} parent=27 // pred_fallthru
        _
      // Predicated region
      $region45: #{basic_block_forward.8} parent=27 // pred_check
        %p341 = pneg %p102
      $region46: #{basic_block_forward.8} parent=27 // pred_check_branch
        %343 = sbr.rel (%p341) target = $region48
      $region47: #{basic_block_forward.8} parent=27 // pred_region
        _
      $region48: #{basic_block_forward.8} parent=27 // pred_fallthru
        _
      // Predicated region
      $region49: #{basic_block_forward.8} parent=27 // pred_check
        %p344 = pneg %p123
      $region50: #{basic_block_forward.8} parent=27 // pred_check_branch
        %346 = sbr.rel (%p344) target = $region52
      $region51: #{basic_block_forward.8} parent=27 // pred_region
        _
      $region52: #{basic_block_forward.8} parent=27 // pred_fallthru
        _
    $region28: #{basic_block_forward.8} parent=5 // pred_fallthru
      _
    %p347 = scmp.le.s32.totalorder 2, %s11
    // Predicated region
    $region53: #{basic_block_forward.8} parent=5 // pred_check
      %p348 = pneg %p347
    $region54: #{basic_block_forward.8} parent=5 // pred_check_branch
      %350 = sbr.rel (%p348) target = $region56
    $region55: #{basic_block_forward.8} parent=5 // pred_region
      %s351 = ssub.s32 %s11, 2
      // Predicated region
      $region57: #{basic_block_forward.8} parent=55 // pred_check
        %p352 = pneg %p87
      $region58: #{basic_block_forward.8} parent=55 // pred_check_branch
        %354 = sbr.rel (%p352) target = $region60
      $region59: #{basic_block_forward.8} parent=55 // pred_region
        %s355 = smul.u32 8, %s17
        %p356 = scmp.lt.s32.totalorder %s355, 15
        %s357 = scalar_select %p356, %s355, 15
        %s358 = smul.addr %s357, 8
        %s359 = scalar_lea.vmem %s2, %s358
      $region60: #{basic_block_forward.8} parent=55 // pred_fallthru
        _
    $region56: #{basic_block_forward.8} parent=5 // pred_fallthru
      _
  $region6: #{basic_block_forward.8} parent=0 // loop_footer
    %s15 = sadd.s32 1, %s11
  $region7: #{basic_block_forward.8} parent=0 // loop_footer_branch
    %10 = sbr.rel target = $region3
  $region8: #{basic_block_forward.8} parent=0 // loop_exit
    _

</llo_original>
